<compile_context>
chip_gen: v7x
topology: tpu7x:2x2x1
jax: 0.10.0
libtpu: 0.0.40
codegen_flags: <defaults>
</compile_context>

<pallas_src>
import functools
import math

import jax
import jax.numpy as jnp
from jax.experimental import pallas as pl
from jax.experimental.pallas import tpu as pltpu


def _gpt2_attn_kernel(x_ref, wqkv_ref, bqkv_ref, wproj_ref, bproj_ref, o_ref,
                      k_scr, v_scr, *, num_heads, head_dim, q_tile):
    """One (batch, query-tile) grid step of causal multi-head attention.

    x_ref:       (tq, C)      this tile's rows of the input
    wqkv_ref:    (H, C, 3D)   head-major packed QKV weights (Q columns pre-scaled)
    bqkv_ref:    (H, 1, 3D)   head-major packed QKV bias
    wproj_ref:   (H, D, C)    output projection split over heads
    bproj_ref:   (1, C)
    o_ref:       (tq, C)      this tile's rows of the output
    k_scr/v_scr: (H, T, D)    persistent per-head K/V cache (rows <= current
                              tile were written by earlier / this step)
    """
    H, D, tq = num_heads, head_dim, q_tile
    tk = tq
    qi = pl.program_id(1)
    q_start = pl.multiple_of(qi * tq, tq)
    in_dtype = x_ref.dtype

    # ---- fused QKV projection for this tile only (head-major by construction) ----
    x_t = x_ref[...]                                        # (tq, C)
    x_b = jnp.broadcast_to(x_t, (H,) + x_t.shape)           # (H, tq, C)
    qkv = jnp.einsum('htc,hce->hte', x_b, wqkv_ref[...],
                     preferred_element_type=jnp.float32)
    qkv = qkv + bqkv_ref[...].astype(jnp.float32)           # (H, tq, 3D) f32
    q_h = qkv[:, :, :D].astype(in_dtype)                    # 1/sqrt(D) already folded in
    k_h = qkv[:, :, D:2 * D].astype(in_dtype)
    v_h = qkv[:, :, 2 * D:].astype(in_dtype)

    # append this tile's K/V to the persistent per-head cache
    k_scr[:, pl.ds(q_start, tq), :] = k_h
    v_scr[:, pl.ds(q_start, tq), :] = v_h

    # ---- online-softmax attention over causal key tiles 0..qi only ----
    row = q_start + jax.lax.broadcasted_iota(jnp.int32, (tq, tk), 0)
    neg_big = jnp.float32(-1e30)

    def kv_step(kt, carry):
        m, l, acc = carry
        k_start = pl.multiple_of(kt * tk, tk)
        k_blk = k_scr[:, pl.ds(k_start, tk), :]             # (H, tk, D)
        v_blk = v_scr[:, pl.ds(k_start, tk), :]             # (H, tk, D)
        s = jnp.einsum('hqd,hkd->hqk', q_h, k_blk,
                       preferred_element_type=jnp.float32)  # (H, tq, tk) f32
        col = k_start + jax.lax.broadcasted_iota(jnp.int32, (tq, tk), 1)
        s = jnp.where((col <= row)[None, :, :], s, neg_big)
        m_new = jnp.maximum(m, jnp.max(s, axis=-1, keepdims=True))
        alpha = jnp.exp(m - m_new)
        p = jnp.exp(s - m_new)                              # f32 softmax stats
        l_new = alpha * l + jnp.sum(p, axis=-1, keepdims=True)
        acc_new = alpha * acc + jnp.einsum(
            'hqk,hkd->hqd', p.astype(in_dtype), v_blk,
            preferred_element_type=jnp.float32)
        return m_new, l_new, acc_new

    m0 = jnp.full((H, tq, 1), -1e30, dtype=jnp.float32)
    l0 = jnp.zeros((H, tq, 1), dtype=jnp.float32)
    acc0 = jnp.zeros((H, tq, D), dtype=jnp.float32)
    _, l, acc = jax.lax.fori_loop(0, qi + 1, kv_step, (m0, l0, acc0))

    o = acc * pl.reciprocal(l, approx=True)                 # (H, tq, D) f32

    # ---- output projection with the head merge folded in (no (tq, C) y scratch) ----
    out_h = jnp.einsum('hqd,hdc->hqc', o.astype(in_dtype), wproj_ref[...],
                       preferred_element_type=jnp.float32)  # (H, tq, C) f32
    out = jnp.sum(out_h, axis=0) + bproj_ref[...].astype(jnp.float32)
    o_ref[...] = out.astype(o_ref.dtype)


def _prepack_weights(w_qkv, b_qkv, w_proj, b_proj, num_heads):
    """Repack nn.Linear-style weights into head-major layouts (done once, outside
    the kernel, where the relayout is free HBM-level data movement)."""
    C = w_proj.shape[0]
    H = num_heads
    D = C // H
    scale = 1.0 / math.sqrt(D)

    wq, wk, wv = w_qkv[:, :C], w_qkv[:, C:2 * C], w_qkv[:, 2 * C:]
    bq, bk, bv = b_qkv[:C], b_qkv[C:2 * C], b_qkv[2 * C:]

    def heads_w(w):   # (C, C) -> (H, C, D)
        return jnp.transpose(w.reshape(C, H, D), (1, 0, 2))

    def heads_b(b):   # (C,) -> (H, 1, D)
        return b.reshape(H, 1, D)

    w_qkv_h = jnp.concatenate([heads_w(wq) * scale, heads_w(wk), heads_w(wv)],
                              axis=-1)                       # (H, C, 3D)
    b_qkv_h = jnp.concatenate([heads_b(bq) * scale, heads_b(bk), heads_b(bv)],
                              axis=-1)                       # (H, 1, 3D)
    w_proj_h = w_proj.reshape(H, D, C)                       # (H, D, C)
    b_proj_2d = b_proj.reshape(1, C)                         # (1, C)
    return w_qkv_h, b_qkv_h, w_proj_h, b_proj_2d


def _default_vmem_limit_bytes():
    """~7/8 of physical VMEM, capped at 100 MiB (so ~56 MiB on v7x, 100 MiB on v5e/v6e)."""
    try:
        cap = getattr(pltpu.get_tpu_info(), "vmem_capacity_bytes", None)
        if cap:
            return int(min(cap * 7 // 8, 100 * 1024 * 1024))
    except Exception:
        pass
    return 64 * 1024 * 1024


def gpt2_attention(x, w_qkv, b_qkv, w_proj, b_proj, *, num_heads,
                   q_tile=None, vmem_limit_bytes=None):
    """x: (B, T, C). w_qkv: (C, 3C), b_qkv: (3C,), w_proj: (C, C), b_proj: (C,).

    Weights follow the (in, out) convention (i.e. pre-transposed PyTorch Linear),
    so the computation is x @ W + b.  Works for f32 or bf16 inputs.
    q_tile: 128 default; 256 recommended on v6e/v7x (256-wide MXUs).
    """
    B, T, C = x.shape
    H = num_heads
    assert C % H == 0
    D = C // H
    if q_tile is None:
        q_tile = min(T, 128)
    assert T % q_tile == 0, "T must be divisible by q_tile"
    n_q = T // q_tile
    if vmem_limit_bytes is None:
        vmem_limit_bytes = _default_vmem_limit_bytes()

    w_qkv_h, b_qkv_h, w_proj_h, b_proj_2d = _prepack_weights(
        w_qkv, b_qkv, w_proj, b_proj, H)

    kernel = functools.partial(_gpt2_attn_kernel,
                               num_heads=H, head_dim=D, q_tile=q_tile)

    return pl.pallas_call(
        kernel,
        out_shape=jax.ShapeDtypeStruct((B, T, C), x.dtype),
        grid_spec=pltpu.PrefetchScalarGridSpec(
            num_scalar_prefetch=0,
            grid=(B, n_q),
            in_specs=[
                # only this tile's rows of x (small, pipelined per step)
                pl.BlockSpec((None, q_tile, C), lambda b, q: (b, q, 0)),
                pl.BlockSpec((H, C, 3 * D), lambda b, q: (0, 0, 0)),
                pl.BlockSpec((H, 1, 3 * D), lambda b, q: (0, 0, 0)),
                pl.BlockSpec((H, D, C), lambda b, q: (0, 0, 0)),
                pl.BlockSpec((1, C), lambda b, q: (0, 0)),
            ],
            out_specs=pl.BlockSpec((None, q_tile, C), lambda b, q: (b, q, 0)),
            scratch_shapes=[
                pltpu.VMEM((H, T, D), x.dtype),   # K cache, per head
                pltpu.VMEM((H, T, D), x.dtype),   # V cache, per head
            ],
        ),
        compiler_params=pltpu.CompilerParams(
            # batch axis parallel (megacore); q-tile axis carries the K/V cache state
            dimension_semantics=("parallel", "arbitrary"),
            vmem_limit_bytes=vmem_limit_bytes,
        ),
    )(x, w_qkv_h, b_qkv_h, w_proj_h, b_proj_2d)


def gpt2_attention_ref(x, w_qkv, b_qkv, w_proj, b_proj, *, num_heads):
    """Pure-JAX reference mirroring the PyTorch forward (eval mode)."""
    B, T, C = x.shape
    D = C // num_heads
    qkv = x @ w_qkv + b_qkv
    q, k, v = jnp.split(qkv, 3, axis=-1)
    q = q.reshape(B, T, num_heads, D).transpose(0, 2, 1, 3)
    k = k.reshape(B, T, num_heads, D).transpose(0, 2, 1, 3)
    v = v.reshape(B, T, num_heads, D).transpose(0, 2, 1, 3)
    att = (q @ jnp.swapaxes(k, -2, -1)) * (1.0 / math.sqrt(D))
    mask = jnp.tril(jnp.ones((T, T), dtype=bool))
    att = jnp.where(mask[None, None], att, -jnp.inf)
    att = jax.nn.softmax(att, axis=-1)
    y = att @ v
    y = y.transpose(0, 2, 1, 3).reshape(B, T, C)
    return y @ w_proj + b_proj


if __name__ == "__main__":
    def run_case(B, T, C, H, q_tile=None):
        ks = jax.random.split(jax.random.PRNGKey(0), 5)
        x = jax.random.normal(ks[0], (B, T, C), dtype=jnp.float32)
        bound = 1.0 / math.sqrt(C)
        w_qkv = jax.random.uniform(ks[1], (C, 3 * C), minval=-bound, maxval=bound,
                                   dtype=jnp.float32)
        b_qkv = jax.random.uniform(ks[2], (3 * C,), minval=-bound, maxval=bound,
                                   dtype=jnp.float32)
        w_proj = jax.random.uniform(ks[3], (C, C), minval=-bound, maxval=bound,
                                    dtype=jnp.float32)
        b_proj = jax.random.uniform(ks[4], (C,), minval=-bound, maxval=bound,
                                    dtype=jnp.float32)
        out = gpt2_attention(x, w_qkv, b_qkv, w_proj, b_proj,
                             num_heads=H, q_tile=q_tile)
        out = jax.block_until_ready(out)
        ref = gpt2_attention_ref(x, w_qkv, b_qkv, w_proj, b_proj, num_heads=H)
        # Tolerance is loosened vs f32-exact because the softmax denominator uses
        # the EUP approximate reciprocal (per perf review).
        err = jnp.max(jnp.abs(out - ref))
        assert jnp.allclose(out, ref, atol=2e-3, rtol=2e-3), (
            f"case {(B, T, C, H, q_tile)}: max abs err {err}")

    # Small shapes consistent with GPT2Config (n_embd=32, n_head=4).
    run_case(B=2, T=8, C=32, H=4)               # single query tile
    run_case(B=2, T=32, C=32, H=4, q_tile=8)    # multi-tile: incremental K/V cache + online softmax
    print("KERNEL_OK")
</pallas_src>

<mosaic_0001>
module attributes {stable_mosaic.version = 11 : i64} {
  func.func @_gpt2_attn_kernel(%arg0: i32, %arg1: i32, %arg2: memref<1x8x32xf32, #tpu.memory_space<vmem>>, %arg3: memref<4x32x24xf32, #tpu.memory_space<vmem>>, %arg4: memref<4x1x24xf32, #tpu.memory_space<vmem>>, %arg5: memref<4x8x32xf32, #tpu.memory_space<vmem>>, %arg6: memref<1x32xf32, #tpu.memory_space<vmem>>, %arg7: memref<1x8x32xf32, #tpu.memory_space<vmem>>, %arg8: memref<4x8x8xf32, #tpu.memory_space<vmem>>, %arg9: memref<4x8x8xf32, #tpu.memory_space<vmem>>) attributes {dimension_semantics = [#tpu.dimension_semantics<parallel>, #tpu.dimension_semantics<arbitrary>], iteration_bounds = array<i64: 2, 1>, scalar_prefetch = 0 : i64, scratch_operands = 2 : i64, tpu.core_type = #tpu.core_type<tc>, window_params = [{transform_indices = @transform_0, window_bounds = array<i64: 1, 8, 32>}, {pipeline_mode = #tpu.pipeline_mode<synchronous>, transform_indices = @transform_1, window_bounds = array<i64: 4, 32, 24>}, {pipeline_mode = #tpu.pipeline_mode<synchronous>, transform_indices = @transform_2, window_bounds = array<i64: 4, 1, 24>}, {pipeline_mode = #tpu.pipeline_mode<synchronous>, transform_indices = @transform_3, window_bounds = array<i64: 4, 8, 32>}, {pipeline_mode = #tpu.pipeline_mode<synchronous>, transform_indices = @transform_4, window_bounds = array<i64: 1, 32>}, {transform_indices = @transform_5, window_bounds = array<i64: 1, 8, 32>}]} {
    %c8_i32 = arith.constant 8 : i32
    %0 = arith.muli %arg1, %c8_i32 : i32
    %1 = tpu.assume_multiple %0, 8 : i32
    %c0 = arith.constant 0 : index
    %c0_0 = arith.constant 0 : index
    %c0_1 = arith.constant 0 : index
    %2 = vector.load %arg2[%c0, %c0_0, %c0_1] : memref<1x8x32xf32, #tpu.memory_space<vmem>>, vector<1x8x32xf32>
    %3 = vector.shape_cast %2 : vector<1x8x32xf32> to vector<8x32xf32>
    %4 = vector.shape_cast %3 : vector<8x32xf32> to vector<1x8x32xf32>
    %5 = vector.broadcast %4 : vector<1x8x32xf32> to vector<4x8x32xf32>
    %c0_2 = arith.constant 0 : index
    %c0_3 = arith.constant 0 : index
    %c0_4 = arith.constant 0 : index
    %6 = vector.load %arg3[%c0_2, %c0_3, %c0_4] : memref<4x32x24xf32, #tpu.memory_space<vmem>>, vector<4x32x24xf32>
    "tpu.trace_start"() <{level = 10 : i32, message = "htc,hce->hte"}> : () -> ()
    %cst = arith.constant dense<0.000000e+00> : vector<4x8x24xf32>
    %7 = tpu.matmul %5, %6, %cst {dimension_numbers = #tpu.dot_dimension_numbers<[2], [1], [1], [2], [0, 0, 0, 1, 1, 2], [0], [0]>} : vector<4x8x32xf32>, vector<4x32x24xf32>, vector<4x8x24xf32> -> vector<4x8x24xf32>
    "tpu.trace_stop"() : () -> ()
    %c0_5 = arith.constant 0 : index
    %c0_6 = arith.constant 0 : index
    %c0_7 = arith.constant 0 : index
    %8 = vector.load %arg4[%c0_5, %c0_6, %c0_7] : memref<4x1x24xf32, #tpu.memory_space<vmem>>, vector<4x1x24xf32>
    %9 = vector.broadcast %8 : vector<4x1x24xf32> to vector<4x8x24xf32>
    %10 = arith.addf %7, %9 : vector<4x8x24xf32>
    %11 = vector.extract_strided_slice %10 {offsets = [0, 0, 0], sizes = [4, 8, 8], strides = [1, 1, 1]} : vector<4x8x24xf32> to vector<4x8x8xf32>
    %12 = vector.extract_strided_slice %10 {offsets = [0, 0, 8], sizes = [4, 8, 8], strides = [1, 1, 1]} : vector<4x8x24xf32> to vector<4x8x8xf32>
    %13 = vector.extract_strided_slice %10 {offsets = [0, 0, 16], sizes = [4, 8, 8], strides = [1, 1, 1]} : vector<4x8x24xf32> to vector<4x8x8xf32>
    %c0_8 = arith.constant 0 : index
    %14 = arith.index_cast %1 : i32 to index
    %c0_9 = arith.constant 0 : index
    %15 = vector.load %arg8[%c0_8, %14, %c0_9] : memref<4x8x8xf32, #tpu.memory_space<vmem>>, vector<4x8x8xf32>
    tpu.vector_store %arg8[%c0_8, %14, %c0_9], %12 {strides = array<i32>} : memref<4x8x8xf32, #tpu.memory_space<vmem>>, vector<4x8x8xf32>,
    %c0_10 = arith.constant 0 : index
    %16 = arith.index_cast %1 : i32 to index
    %c0_11 = arith.constant 0 : index
    %17 = vector.load %arg9[%c0_10, %16, %c0_11] : memref<4x8x8xf32, #tpu.memory_space<vmem>>, vector<4x8x8xf32>
    tpu.vector_store %arg9[%c0_10, %16, %c0_11], %13 {strides = array<i32>} : memref<4x8x8xf32, #tpu.memory_space<vmem>>, vector<4x8x8xf32>,
    %18 = tpu.iota {dimensions = array<i32: 0>} : vector<8x8xi32>
    %19 = vector.broadcast %1 : i32 to vector<8x8xi32>
    %20 = arith.addi %19, %18 : vector<8x8xi32>
    %cst_12 = arith.constant -1.000000e+30 : f32
    %21 = vector.broadcast %cst_12 : f32 to vector<4x8x1xf32>
    %cst_13 = arith.constant 0.000000e+00 : f32
    %22 = vector.broadcast %cst_13 : f32 to vector<4x8x1xf32>
    %cst_14 = arith.constant 0.000000e+00 : f32
    %23 = vector.broadcast %cst_14 : f32 to vector<4x8x8xf32>
    %c1_i32 = arith.constant 1 : i32
    %24 = arith.addi %arg1, %c1_i32 : i32
    %cst_15 = arith.constant -1.000000e+30 : f32
    %c0_i32 = arith.constant 0 : i32
    %25 = arith.subi %24, %c0_i32 : i32
    %26 = arith.addi %c0_i32, %25 : i32
    %c1_i32_16 = arith.constant 1 : i32
    %27:3 = scf.for %arg10 = %c0_i32 to %26 step %c1_i32_16 iter_args(%arg11 = %21, %arg12 = %22, %arg13 = %23) -> (vector<4x8x1xf32>, vector<4x8x1xf32>, vector<4x8x8xf32>)  : i32 {
      %c8_i32_27 = arith.constant 8 : i32
      %40 = arith.muli %arg10, %c8_i32_27 : i32
      %41 = tpu.assume_multiple %40, 8 : i32
      %c0_28 = arith.constant 0 : index
      %42 = arith.index_cast %41 : i32 to index
      %c0_29 = arith.constant 0 : index
      %43 = vector.load %arg8[%c0_28, %42, %c0_29] : memref<4x8x8xf32, #tpu.memory_space<vmem>>, vector<4x8x8xf32>
      %c0_30 = arith.constant 0 : index
      %44 = arith.index_cast %41 : i32 to index
      %c0_31 = arith.constant 0 : index
      %45 = vector.load %arg9[%c0_30, %44, %c0_31] : memref<4x8x8xf32, #tpu.memory_space<vmem>>, vector<4x8x8xf32>
      "tpu.trace_start"() <{level = 10 : i32, message = "hqd,hkd->hqk"}> : () -> ()
      %cst_32 = arith.constant dense<0.000000e+00> : vector<4x8x8xf32>
      %46 = tpu.matmul %11, %43, %cst_32 {dimension_numbers = #tpu.dot_dimension_numbers<[2], [2], [1], [1], [0, 0, 0, 1, 1, 1], [0], [0]>} : vector<4x8x8xf32>, vector<4x8x8xf32>, vector<4x8x8xf32> -> vector<4x8x8xf32>
      "tpu.trace_stop"() : () -> ()
      %47 = tpu.iota {dimensions = array<i32: 1>} : vector<8x8xi32>
      %48 = vector.broadcast %41 : i32 to vector<8x8xi32>
      %49 = arith.addi %48, %47 : vector<8x8xi32>
      %50 = arith.cmpi sle, %49, %20 : vector<8x8xi32>
      %51 = vector.shape_cast %50 : vector<8x8xi1> to vector<1x8x8xi1>
      %52 = vector.shape_cast %51 : vector<1x8x8xi1> to vector<1x8x8xi1>
      %53 = vector.broadcast %52 : vector<1x8x8xi1> to vector<4x8x8xi1>
      %54 = vector.broadcast %cst_15 : f32 to vector<4x8x8xf32>
      %55 = arith.select %53, %46, %54 : vector<4x8x8xi1>, vector<4x8x8xf32>
      %cst_33 = arith.constant dense<0xFF800000> : vector<4x8xf32>
      %56 = vector.multi_reduction <maximumf>, %55, %cst_33 [2] : vector<4x8x8xf32> to vector<4x8xf32>
      %57 = vector.shape_cast %56 : vector<4x8xf32> to vector<4x8x1xf32>
      %58 = arith.maximumf %arg11, %57 : vector<4x8x1xf32>
      %59 = arith.subf %arg11, %58 : vector<4x8x1xf32>
      %60 = math.exp %59 : vector<4x8x1xf32>
      %61 = vector.broadcast %58 : vector<4x8x1xf32> to vector<4x8x8xf32>
      %62 = arith.subf %55, %61 : vector<4x8x8xf32>
      %63 = math.exp %62 : vector<4x8x8xf32>
      %64 = arith.mulf %60, %arg12 : vector<4x8x1xf32>
      %cst_34 = arith.constant dense<0.000000e+00> : vector<4x8xf32>
      %65 = vector.multi_reduction <add>, %63, %cst_34 [2] : vector<4x8x8xf32> to vector<4x8xf32>
      %66 = vector.shape_cast %65 : vector<4x8xf32> to vector<4x8x1xf32>
      %67 = arith.addf %64, %66 : vector<4x8x1xf32>
      %68 = vector.broadcast %60 : vector<4x8x1xf32> to vector<4x8x8xf32>
      %69 = arith.mulf %68, %arg13 : vector<4x8x8xf32>
      "tpu.trace_start"() <{level = 10 : i32, message = "hqk,hkd->hqd"}> : () -> ()
      %cst_35 = arith.constant dense<0.000000e+00> : vector<4x8x8xf32>
      %70 = tpu.matmul %63, %45, %cst_35 {dimension_numbers = #tpu.dot_dimension_numbers<[2], [1], [1], [2], [0, 0, 0, 1, 1, 2], [0], [0]>} : vector<4x8x8xf32>, vector<4x8x8xf32>, vector<4x8x8xf32> -> vector<4x8x8xf32>
      "tpu.trace_stop"() : () -> ()
      %71 = arith.addf %69, %70 : vector<4x8x8xf32>
      scf.yield %58, %67, %71 : vector<4x8x1xf32>, vector<4x8x1xf32>, vector<4x8x8xf32>
    }
    %28 = tpu.reciprocal %27#1 {approx = true} : vector<4x8x1xf32> -> vector<4x8x1xf32>
    %29 = vector.broadcast %28 : vector<4x8x1xf32> to vector<4x8x8xf32>
    %30 = arith.mulf %27#2, %29 : vector<4x8x8xf32>
    %c0_17 = arith.constant 0 : index
    %c0_18 = arith.constant 0 : index
    %c0_19 = arith.constant 0 : index
    %31 = vector.load %arg5[%c0_17, %c0_18, %c0_19] : memref<4x8x32xf32, #tpu.memory_space<vmem>>, vector<4x8x32xf32>
    "tpu.trace_start"() <{level = 10 : i32, message = "hqd,hdc->hqc"}> : () -> ()
    %cst_20 = arith.constant dense<0.000000e+00> : vector<4x8x32xf32>
    %32 = tpu.matmul %30, %31, %cst_20 {dimension_numbers = #tpu.dot_dimension_numbers<[2], [1], [1], [2], [0, 0, 0, 1, 1, 2], [0], [0]>} : vector<4x8x8xf32>, vector<4x8x32xf32>, vector<4x8x32xf32> -> vector<4x8x32xf32>
    "tpu.trace_stop"() : () -> ()
    %cst_21 = arith.constant dense<0.000000e+00> : vector<8x32xf32>
    %33 = vector.multi_reduction <add>, %32, %cst_21 [0] : vector<4x8x32xf32> to vector<8x32xf32>
    %c0_22 = arith.constant 0 : index
    %c0_23 = arith.constant 0 : index
    %34 = vector.load %arg6[%c0_22, %c0_23] : memref<1x32xf32, #tpu.memory_space<vmem>>, vector<1x32xf32>
    %35 = vector.broadcast %34 : vector<1x32xf32> to vector<8x32xf32>
    %36 = arith.addf %33, %35 : vector<8x32xf32>
    %c0_24 = arith.constant 0 : index
    %c0_25 = arith.constant 0 : index
    %c0_26 = arith.constant 0 : index
    %37 = vector.load %arg7[%c0_24, %c0_25, %c0_26] : memref<1x8x32xf32, #tpu.memory_space<vmem>>, vector<1x8x32xf32>
    %38 = vector.shape_cast %37 : vector<1x8x32xf32> to vector<8x32xf32>
    %39 = vector.shape_cast %36 : vector<8x32xf32> to vector<1x8x32xf32>
    tpu.vector_store %arg7[%c0_24, %c0_25, %c0_26], %39 {strides = array<i32>} : memref<1x8x32xf32, #tpu.memory_space<vmem>>, vector<1x8x32xf32>,
    return
  }
  func.func @transform_0(%arg0: i32, %arg1: i32) -> (i32, i32, i32) {
    %c0_i32 = arith.constant 0 : i32
    %c0_i32_0 = arith.constant 0 : i32
    return %arg0, %arg1, %c0_i32 : i32, i32, i32
  }
  func.func @transform_1(%arg0: i32, %arg1: i32) -> (i32, i32, i32) {
    %c0_i32 = arith.constant 0 : i32
    %c0_i32_0 = arith.constant 0 : i32
    %c0_i32_1 = arith.constant 0 : i32
    %c0_i32_2 = arith.constant 0 : i32
    return %c0_i32, %c0_i32_0, %c0_i32_1 : i32, i32, i32
  }
  func.func @transform_2(%arg0: i32, %arg1: i32) -> (i32, i32, i32) {
    %c0_i32 = arith.constant 0 : i32
    %c0_i32_0 = arith.constant 0 : i32
    %c0_i32_1 = arith.constant 0 : i32
    %c0_i32_2 = arith.constant 0 : i32
    return %c0_i32, %c0_i32_0, %c0_i32_1 : i32, i32, i32
  }
  func.func @transform_3(%arg0: i32, %arg1: i32) -> (i32, i32, i32) {
    %c0_i32 = arith.constant 0 : i32
    %c0_i32_0 = arith.constant 0 : i32
    %c0_i32_1 = arith.constant 0 : i32
    %c0_i32_2 = arith.constant 0 : i32
    return %c0_i32, %c0_i32_0, %c0_i32_1 : i32, i32, i32
  }
  func.func @transform_4(%arg0: i32, %arg1: i32) -> (i32, i32) {
    %c0_i32 = arith.constant 0 : i32
    %c0_i32_0 = arith.constant 0 : i32
    %c0_i32_1 = arith.constant 0 : i32
    return %c0_i32, %c0_i32_0 : i32, i32
  }
  func.func @transform_5(%arg0: i32, %arg1: i32) -> (i32, i32, i32) {
    %c0_i32 = arith.constant 0 : i32
    %c0_i32_0 = arith.constant 0 : i32
    return %arg0, %arg1, %c0_i32 : i32, i32, i32
  }
}

</mosaic_0001>

<llo_original>
// kernel: tpu_custom_call.1
$region0: #{tpu_custom_call.1}
  #allocation0 [shape = 'u32[]', space=smem, size = 0x4, offset = 0x4, fixed_abs, tag = 'smem constant byte address 0x4 - core index']
  #allocation1 [shape = 'u32[144,128]{1,0:T(1,128)}', space=vmem, size = 0x12000, scoped, tag = 'internal scratch']
  #allocation2 [shape = 'f32[4,8,8]{2,1,0:T(8,128)}', space=vmem, size = 0x4000, scoped, tag = 'scratch operand']
  #allocation3 [shape = 'f32[4,8,8]{2,1,0:T(8,128)}', space=vmem, size = 0x4000, scoped, tag = 'scratch operand']
  %s0 = inlined_call_operand.hbm [shape: f32[2,8,32], index: 0, kind: input, shape index: {}]
  %s1 = inlined_call_operand.hbm [shape: f32[4,32,24], index: 1, kind: input, shape index: {}]
  %s2 = inlined_call_operand.hbm [shape: f32[4,1,24], index: 2, kind: input, shape index: {}]
  %s3 = inlined_call_operand.hbm [shape: f32[4,8,32], index: 3, kind: input, shape index: {}]
  %s4 = inlined_call_operand.hbm [shape: f32[1,32], index: 4, kind: input, shape index: {}]
  %s5 = inlined_call_operand.hbm [shape: f32[2,8,32], index: 5, kind: output, shape index: {}]
  %s6 = sld [smem:[#allocation0]]
  $region80: #{tpu_custom_call.1} parent=0
    _
  %s8 = ssub.s32 1, %s6
  %s9 = scalar_select 0, %s8, %s6
  $region1: #{tpu_custom_call.1} parent=0
    #allocation4 [shape = 'u8[8192]{0}', space=vmem, size = 0x2000, scoped, tag = 'input window, operand 0']
    #allocation5 [shape = 's32[2]{0}', space=sflag, size = 0x8, scoped, tag = 'scoped memory for tpu_custom_call.1']
    #allocation6 [shape = 's32[2]{0}', space=sflag, size = 0x8, scoped, tag = 'scoped memory for tpu_custom_call.1']
    #allocation7 [shape = 'u8[65536]{0}', space=vmem, size = 0x10000, scoped, tag = 'input window, operand 1, single buffered']
    #allocation8 [shape = 's32[1]{0}', space=sflag, size = 0x4, scoped, tag = 'scoped memory for tpu_custom_call.1']
    #allocation9 [shape = 'u8[2048]{0}', space=vmem, size = 0x800, scoped, tag = 'input window, operand 2, single buffered']
    #allocation10 [shape = 'u8[16384]{0}', space=vmem, size = 0x4000, scoped, tag = 'input window, operand 3, single buffered']
    #allocation11 [shape = 's32[1]{0}', space=sflag, size = 0x4, scoped, tag = 'scoped memory for tpu_custom_call.1']
    #allocation12 [shape = 'u8[512]{0}', space=vmem, size = 0x400, scoped, tag = 'input window, operand 4, single buffered']
    #allocation13 [shape = 'u8[8192]{0}', space=vmem, size = 0x2000, scoped, tag = 'output window, operand 0']
    %10 = vsyncpa [#allocation5], 0
    %s11 = scalar_lea.sflag [#allocation5], 1
    %12 = vsyncpa %s11, 0
    %13 = vsyncpa [#allocation8], 0
    %14 = vsyncpa [#allocation11], 0
    %15 = vsyncpa [#allocation6], 0
    %s16 = scalar_lea.sflag [#allocation6], 1
    %17 = vsyncpa %s16, 0
    loop: start=0, step=1, limit=4
    $region2: #{tpu_custom_call.1} parent=1 // loop_pre_header
      _
    $region3: #{tpu_custom_call.1} parent=1 // loop_header
      %s19 = sphi 0, %s23
      %p20 = scmp.ge.s32.totalorder %s19, 4
      %s26 = sphi 0, %s38
      %s27 = sphi 0, %s34
      %s28 = sphi 0, %s26
      %s29 = sphi 0, %s27
      %s30 = sphi 0, %s28
      %s31 = sphi 0, %s29
      %s43 = sphi 0, %s45
      %s46 = sphi 0, %s43
      %s47 = sphi 0, %s46
      %s63 = sphi 0, %s47
      %s67 = sphi 0, %s67
      %s69 = sphi 0, %s67
      %s70 = sphi 0, %s69
      %s84 = sphi 0, %s70
      %s88 = sphi 0, %s88
      %s90 = sphi 0, %s88
      %s91 = sphi 0, %s90
      %s105 = sphi 0, %s91
      %s109 = sphi 0, %s109
      %s111 = sphi 0, %s109
      %s112 = sphi 0, %s111
      %s126 = sphi 0, %s112
      %s130 = sphi 0, %s130
      %s132 = sphi 0, %s130
      %s133 = sphi 0, %s132
      %s147 = sphi 0, %s133
      %s155 = sphi 0, %s157
      %s158 = sphi 0, %s155
      %s159 = sphi 0, %s158
      %s175 = sphi 0, %s159
    $region4: #{tpu_custom_call.1} parent=1 // loop_header_branch
      %22 = sbr.rel (%p20) target = $region8
    $region5: #{tpu_custom_call.1} parent=1 // loop_body
      %s24 = ssub.s32 %s19, 1
      %s25 = ssub.s32 %s19, 2
      %s32 = sadd.s32 1, %s27
      %p33 = scmp.ge.s32.totalorder %s32, 1
      %s34 = scalar_select %p33, 0, %s32
      %s35 = sadd.s32 1, %s26
      %s36 = scalar_select %p33, %s35, %s26
      %p37 = scmp.ge.s32.totalorder %s36, 2
      %s38 = scalar_select %p37, 0, %s36
      %s39 = ssub.s32 %s26, %s38
      %s40 = ssub.s32 %s27, %s34
      %s41 = sor.u32 %s39, %s40
      %p42 = scmp.eq.s32.totalorder %s41, 0
      %s44 = sadd.s32 %s43, 1
      %s45 = scalar_select %p42, %s43, %s44
      %p48 = pneg %p42
      %p49 = scmp.eq.s32.totalorder %s19, 1
      %p50 = por %p48, %p49
      %p51 = scmp.ne.s32.totalorder %s43, %s46
      %p52 = scmp.eq.s32.totalorder %s19, 0
      %p53 = por %p51, %p52
      %p54 = scmp.ne.s32.totalorder %s43, %s46
      %p55 = scmp.eq.s32.totalorder %s24, 1
      %p56 = por %p54, %p55
      %p57 = scmp.ne.s32.totalorder %s46, %s47
      %p58 = scmp.eq.s32.totalorder %s24, 0
      %p59 = por %p57, %p58
      %p60 = scmp.ne.s32.totalorder %s46, %s47
      %p61 = scmp.eq.s32.totalorder %s25, 1
      %p62 = por %p60, %p61
      %p64 = scmp.ne.s32.totalorder %s47, %s63
      %p65 = scmp.eq.s32.totalorder %s25, 0
      %p66 = por %p64, %p65
      %s68 = sadd.s32 %s67, 1
      %p71 = scmp.eq.s32.totalorder %s19, 1
      %p72 = scmp.ne.s32.totalorder %s67, %s69
      %p73 = scmp.eq.s32.totalorder %s19, 0
      %p74 = por %p72, %p73
      %p75 = scmp.ne.s32.totalorder %s67, %s69
      %p76 = scmp.eq.s32.totalorder %s24, 1
      %p77 = por %p75, %p76
      %p78 = scmp.ne.s32.totalorder %s69, %s70
      %p79 = scmp.eq.s32.totalorder %s24, 0
      %p80 = por %p78, %p79
      %p81 = scmp.ne.s32.totalorder %s69, %s70
      %p82 = scmp.eq.s32.totalorder %s25, 1
      %p83 = por %p81, %p82
      %p85 = scmp.ne.s32.totalorder %s70, %s84
      %p86 = scmp.eq.s32.totalorder %s25, 0
      %p87 = por %p85, %p86
      %s89 = sadd.s32 %s88, 1
      %p92 = scmp.eq.s32.totalorder %s19, 1
      %p93 = scmp.ne.s32.totalorder %s88, %s90
      %p94 = scmp.eq.s32.totalorder %s19, 0
      %p95 = por %p93, %p94
      %p96 = scmp.ne.s32.totalorder %s88, %s90
      %p97 = scmp.eq.s32.totalorder %s24, 1
      %p98 = por %p96, %p97
      %p99 = scmp.ne.s32.totalorder %s90, %s91
      %p100 = scmp.eq.s32.totalorder %s24, 0
      %p101 = por %p99, %p100
      %p102 = scmp.ne.s32.totalorder %s90, %s91
      %p103 = scmp.eq.s32.totalorder %s25, 1
      %p104 = por %p102, %p103
      %p106 = scmp.ne.s32.totalorder %s91, %s105
      %p107 = scmp.eq.s32.totalorder %s25, 0
      %p108 = por %p106, %p107
      %s110 = sadd.s32 %s109, 1
      %p113 = scmp.eq.s32.totalorder %s19, 1
      %p114 = scmp.ne.s32.totalorder %s109, %s111
      %p115 = scmp.eq.s32.totalorder %s19, 0
      %p116 = por %p114, %p115
      %p117 = scmp.ne.s32.totalorder %s109, %s111
      %p118 = scmp.eq.s32.totalorder %s24, 1
      %p119 = por %p117, %p118
      %p120 = scmp.ne.s32.totalorder %s111, %s112
      %p121 = scmp.eq.s32.totalorder %s24, 0
      %p122 = por %p120, %p121
      %p123 = scmp.ne.s32.totalorder %s111, %s112
      %p124 = scmp.eq.s32.totalorder %s25, 1
      %p125 = por %p123, %p124
      %p127 = scmp.ne.s32.totalorder %s112, %s126
      %p128 = scmp.eq.s32.totalorder %s25, 0
      %p129 = por %p127, %p128
      %s131 = sadd.s32 %s130, 1
      %p134 = scmp.eq.s32.totalorder %s19, 1
      %p135 = scmp.ne.s32.totalorder %s130, %s132
      %p136 = scmp.eq.s32.totalorder %s19, 0
      %p137 = por %p135, %p136
      %p138 = scmp.ne.s32.totalorder %s130, %s132
      %p139 = scmp.eq.s32.totalorder %s24, 1
      %p140 = por %p138, %p139
      %p141 = scmp.ne.s32.totalorder %s132, %s133
      %p142 = scmp.eq.s32.totalorder %s24, 0
      %p143 = por %p141, %p142
      %p144 = scmp.ne.s32.totalorder %s132, %s133
      %p145 = scmp.eq.s32.totalorder %s25, 1
      %p146 = por %p144, %p145
      %p148 = scmp.ne.s32.totalorder %s133, %s147
      %p149 = scmp.eq.s32.totalorder %s25, 0
      %p150 = por %p148, %p149
      %s151 = ssub.s32 %s26, %s38
      %s152 = ssub.s32 %s27, %s34
      %s153 = sor.u32 %s151, %s152
      %p154 = scmp.eq.s32.totalorder %s153, 0
      %s156 = sadd.s32 %s155, 1
      %s157 = scalar_select %p154, %s155, %s156
      %p160 = pneg %p154
      %p161 = scmp.eq.s32.totalorder %s19, 1
      %p162 = por %p160, %p161
      %p163 = scmp.ne.s32.totalorder %s155, %s158
      %p164 = scmp.eq.s32.totalorder %s19, 0
      %p165 = por %p163, %p164
      %p166 = scmp.ne.s32.totalorder %s155, %s158
      %p167 = scmp.eq.s32.totalorder %s24, 1
      %p168 = por %p166, %p167
      %p169 = scmp.ne.s32.totalorder %s158, %s159
      %p170 = scmp.eq.s32.totalorder %s24, 0
      %p171 = por %p169, %p170
      %p172 = scmp.ne.s32.totalorder %s158, %s159
      %p173 = scmp.eq.s32.totalorder %s25, 1
      %p174 = por %p172, %p173
      %p176 = scmp.ne.s32.totalorder %s159, %s175
      %p177 = scmp.eq.s32.totalorder %s25, 0
      %p178 = por %p176, %p177
      %p179 = scmp.le.s32.totalorder 1, %s19
      %p180 = scmp.lt.s32.totalorder %s19, 3
      %p181 = pnand %p179, %p180
      %p182 = pneg %p181
      // Predicated region
      $region9: #{tpu_custom_call.1} parent=5 // pred_check
        _
      $region10: #{tpu_custom_call.1} parent=5 // pred_check_branch
        %184 = sbr.rel (%p181) target = $region12
      $region11: #{tpu_custom_call.1} parent=5 // pred_region
        %s185 = ssub.s32 %s19, 1
        // Predicated region
        $region13: #{tpu_custom_call.1} parent=11 // pred_check
          %p186 = pneg %p80
        $region14: #{tpu_custom_call.1} parent=11 // pred_check_branch
          %188 = sbr.rel (%p186) target = $region16
        $region15: #{tpu_custom_call.1} parent=11 // pred_region
          %s190 = ssub.s32 2048, 2048
          %191 = vsyncadd [#allocation8], %s190
          %s192 = sshll.u32 [#allocation7], 4
          %s193 = int_to_ptr.vmem [resolvable:$true] %s192
          %198 = dma.hbm_to_vmem [thread:$0]  %s1, 2048, %s193, [#allocation8], 128, 128, 8
        $region16: #{tpu_custom_call.1} parent=11 // pred_fallthru
          _
        // Predicated region
        $region17: #{tpu_custom_call.1} parent=11 // pred_check
          %p199 = pneg %p101
        $region18: #{tpu_custom_call.1} parent=11 // pred_check_branch
          %201 = sbr.rel (%p199) target = $region20
        $region19: #{tpu_custom_call.1} parent=11 // pred_region
          %s203 = ssub.s32 64, 64
          %204 = vsyncadd [#allocation8], %s203
          %s205 = sshll.u32 [#allocation9], 4
          %s206 = int_to_ptr.vmem [resolvable:$true] %s205
          %211 = dma.hbm_to_vmem [thread:$0]  %s2, 64, %s206, [#allocation8], 16, 16, 1
        $region20: #{tpu_custom_call.1} parent=11 // pred_fallthru
          _
        // Predicated region
        $region21: #{tpu_custom_call.1} parent=11 // pred_check
          %p212 = pneg %p122
        $region22: #{tpu_custom_call.1} parent=11 // pred_check_branch
          %214 = sbr.rel (%p212) target = $region24
        $region23: #{tpu_custom_call.1} parent=11 // pred_region
          %s216 = ssub.s32 512, 512
          %217 = vsyncadd [#allocation11], %s216
          %s218 = sshll.u32 [#allocation10], 4
          %s219 = int_to_ptr.vmem [resolvable:$true] %s218
          %224 = dma.hbm_to_vmem [thread:$0]  %s3, 512, %s219, [#allocation11], 128, 128, 8
        $region24: #{tpu_custom_call.1} parent=11 // pred_fallthru
          _
        // Predicated region
        $region25: #{tpu_custom_call.1} parent=11 // pred_check
          %p225 = pneg %p143
        $region26: #{tpu_custom_call.1} parent=11 // pred_check_branch
          %227 = sbr.rel (%p225) target = $region28
        $region27: #{tpu_custom_call.1} parent=11 // pred_region
          %s229 = ssub.s32 16, 16
          %230 = vsyncadd [#allocation11], %s229
          %s232 = sshll.u32 [#allocation12], 4
          %s233 = int_to_ptr.vmem [resolvable:$true] %s232
          %235 = dma.hbm_to_vmem [thread:$0]  %s4, 16, %s233, [#allocation11]
        $region28: #{tpu_custom_call.1} parent=11 // pred_fallthru
          _
      $region12: #{tpu_custom_call.1} parent=5 // pred_fallthru
        _
      %p236 = scmp.lt.s32.totalorder %s19, 2
      // Predicated region
      $region29: #{tpu_custom_call.1} parent=5 // pred_check
        %p237 = pneg %p236
      $region30: #{tpu_custom_call.1} parent=5 // pred_check_branch
        %239 = sbr.rel (%p237) target = $region32
      $region31: #{tpu_custom_call.1} parent=5 // pred_region
        // Predicated region
        $region33: #{tpu_custom_call.1} parent=31 // pred_check
          %p240 = pneg %p53
        $region34: #{tpu_custom_call.1} parent=31 // pred_check_branch
          %242 = sbr.rel (%p240) target = $region36
        $region35: #{tpu_custom_call.1} parent=31 // pred_region
          %s243 = sand.u32 %s43, 1
          %s244 = scalar_lea.sflag [#allocation5], %s243
          %s245 = sand.u32 %s43, 1
          %s246 = smul.addr %s245, 8
          %s247 = scalar_lea.vmem [#allocation4], %s246
          %s249 = ssub.s32 128, 128
          %250 = vsyncadd %s244, %s249
          %s251 = sadd.s32 %s27, %s26
          %s252 = smul.addr %s251, 128
          %s253 = scalar_lea.hbm %s0, %s252
          %s255 = sshll.u32 %s247, 4
          %s256 = int_to_ptr.vmem [resolvable:$true] %s255
          %258 = dma.hbm_to_vmem [thread:$0]  %s253, 128, %s256, %s244
        $region36: #{tpu_custom_call.1} parent=31 // pred_fallthru
          _
      $region32: #{tpu_custom_call.1} parent=5 // pred_fallthru
        _
      %p259 = scmp.le.s32.totalorder 1, %s19
      %p260 = scmp.lt.s32.totalorder %s19, 3
      %p261 = pnand %p259, %p260
      %p262 = pneg %p261
      // Predicated region
      $region37: #{tpu_custom_call.1} parent=5 // pred_check
        _
      $region38: #{tpu_custom_call.1} parent=5 // pred_check_branch
        %264 = sbr.rel (%p261) target = $region40
      $region39: #{tpu_custom_call.1} parent=5 // pred_region
        %s265 = ssub.s32 %s19, 1
        %s266 = sand.u32 %s46, 1
        %s267 = scalar_lea.sflag [#allocation5], %s266
        %s268 = sand.u32 %s46, 1
        %s269 = smul.addr %s268, 8
        %s270 = scalar_lea.vmem [#allocation4], %s269
        // Predicated region
        $region41: #{tpu_custom_call.1} parent=39 // pred_check
          %p271 = pneg %p59
        $region42: #{tpu_custom_call.1} parent=39 // pred_check_branch
          %273 = sbr.rel (%p271) target = $region44
        $region43: #{tpu_custom_call.1} parent=39 // pred_region
          %274 = dma.done %s267, 128
        $region44: #{tpu_custom_call.1} parent=39 // pred_fallthru
          _
        // Predicated region
        $region45: #{tpu_custom_call.1} parent=39 // pred_check
          %p275 = pneg %p80
        $region46: #{tpu_custom_call.1} parent=39 // pred_check_branch
          %277 = sbr.rel (%p275) target = $region48
        $region47: #{tpu_custom_call.1} parent=39 // pred_region
          %278 = dma.done [#allocation8], 2048
        $region48: #{tpu_custom_call.1} parent=39 // pred_fallthru
          _
        // Predicated region
        $region49: #{tpu_custom_call.1} parent=39 // pred_check
          %p279 = pneg %p101
        $region50: #{tpu_custom_call.1} parent=39 // pred_check_branch
          %281 = sbr.rel (%p279) target = $region52
        $region51: #{tpu_custom_call.1} parent=39 // pred_region
          %282 = dma.done [#allocation8], 64
        $region52: #{tpu_custom_call.1} parent=39 // pred_fallthru
          _
        // Predicated region
        $region53: #{tpu_custom_call.1} parent=39 // pred_check
          %p283 = pneg %p122
        $region54: #{tpu_custom_call.1} parent=39 // pred_check_branch
          %285 = sbr.rel (%p283) target = $region56
        $region55: #{tpu_custom_call.1} parent=39 // pred_region
          %286 = dma.done [#allocation11], 512
        $region56: #{tpu_custom_call.1} parent=39 // pred_fallthru
          _
        // Predicated region
        $region57: #{tpu_custom_call.1} parent=39 // pred_check
          %p287 = pneg %p143
        $region58: #{tpu_custom_call.1} parent=39 // pred_check_branch
          %289 = sbr.rel (%p287) target = $region60
        $region59: #{tpu_custom_call.1} parent=39 // pred_region
          %290 = dma.done [#allocation11], 16
        $region60: #{tpu_custom_call.1} parent=39 // pred_fallthru
          _
        %s291 = sand.u32 %s46, 1
        %s292 = scalar_lea.sflag [#allocation5], %s291
        %s293 = sand.u32 %s46, 1
        %s294 = smul.addr %s293, 8
        %s295 = scalar_lea.vmem [#allocation4], %s294
        %p296 = pneg %p59
        %p297 = pneg %p56
        %p298 = pneg %p80
        %p299 = pneg %p77
        %p300 = pneg %p101
        %p301 = pneg %p98
        %p302 = pneg %p122
        %p303 = pneg %p119
        %p304 = pneg %p143
        %p305 = pneg %p140
        %p306 = pneg %p171
        %p307 = pneg %p168
        %s308 = sand.u32 %s158, 1
        %s309 = scalar_lea.sflag [#allocation6], %s308
        %s310 = sand.u32 %s158, 1
        %s311 = smul.addr %s310, 8
        %s312 = scalar_lea.vmem [#allocation13], %s311
        %s313 = smul.u32 %s29, 8
        %v314 = vld [vmem:[%s270] sm:$0xff]
        %v315 = vld [vmem:[#allocation7] sm:$0xff]
        %v316 = vld [vmem:[#allocation7 + $0x8] sm:$0xff]
        %v317 = vld [vmem:[#allocation7 + $0x10] sm:$0xff]
        %v318 = vld [vmem:[#allocation7 + $0x18] sm:$0xff]
        %v319 = vld [vmem:[#allocation7 + $0x20] sm:$0xff]
        %v320 = vld [vmem:[#allocation7 + $0x28] sm:$0xff]
        %v321 = vld [vmem:[#allocation7 + $0x30] sm:$0xff]
        %v322 = vld [vmem:[#allocation7 + $0x38] sm:$0xff]
        %v323 = vld [vmem:[#allocation7 + $0x40] sm:$0xff]
        %v324 = vld [vmem:[#allocation7 + $0x48] sm:$0xff]
        %v325 = vld [vmem:[#allocation7 + $0x50] sm:$0xff]
        %v326 = vld [vmem:[#allocation7 + $0x58] sm:$0xff]
        %v327 = vld [vmem:[#allocation7 + $0x60] sm:$0xff]
        %v328 = vld [vmem:[#allocation7 + $0x68] sm:$0xff]
        %v329 = vld [vmem:[#allocation7 + $0x70] sm:$0xff]
        %v330 = vld [vmem:[#allocation7 + $0x78] sm:$0xff]
        %v331 = vld [vmem:[#allocation9] sm:$0x1]
        %v332 = vld [vmem:[#allocation9 + $0x1] sm:$0x1]
        %v333 = vld [vmem:[#allocation9 + $0x2] sm:$0x1]
        %v334 = vld [vmem:[#allocation9 + $0x3] sm:$0x1]
        %v339 = vlaneseq
        %v340 = vshrl.u32 %v339, 7
        %v341 = vsub.s32 0, %v340
        %v342 = vrot.slane %v331, %v341
        %v343 = vlaneseq
        %v344 = vshrl.u32 %v343, 7
        %v345 = vsub.s32 0, %v344
        %v346 = vrot.slane %v332, %v345
        %v347 = vlaneseq
        %v348 = vshrl.u32 %v347, 7
        %v349 = vsub.s32 0, %v348
        %v350 = vrot.slane %v333, %v349
        %v351 = vlaneseq
        %v352 = vshrl.u32 %v351, 7
        %v353 = vsub.s32 0, %v352
        %v354 = vrot.slane %v334, %v353
        %vm359 = vcmask 261120
        %v361 = vsel %vm359, %v314, 0
        %363 = vmatprep.subr.mxu0 0.0
        %364 = vmatpush1.msra.mxu0 %v315
        %365 = vmatprep.subr.mxu0 0.0
        %366 = vmatpush1.msra.mxu0 %v316
        %367 = vmatprep.subr.mxu0 0.0
        %368 = vmatpush1.msra.mxu0 %v317
        %369 = vmatprep.subr.mxu0 0.0
        %370 = vmatpush1.msra.mxu0 %v318
        %371 = vmatprep.subr.mxu0 0.0
        %372 = vmatpush1.msra.mxu0 0.0
        %373 = vmatprep.subr.mxu0 0.0
        %374 = vmatpush1.msra.mxu0 0.0
        %375 = vmatprep.subr.mxu0 0.0
        %376 = vmatpush1.msra.mxu0 0.0
        %377 = vmatprep.subr.mxu0 0.0
        %378 = vmatpush1.msra.mxu0 0.0
        %379 = vmatprep.subr.mxu0 0.0
        %380 = vmatpush1.msra.mxu0 0.0
        %381 = vmatprep.subr.mxu0 0.0
        %382 = vmatpush1.msra.mxu0 0.0
        %383 = vmatprep.subr.mxu0 0.0
        %384 = vmatpush1.msra.mxu0 0.0
        %385 = vmatprep.subr.mxu0 0.0
        %386 = vmatpush1.msra.mxu0 0.0
        %387 = vmatprep.subr.mxu0 0.0
        %388 = vmatpush1.msra.mxu0 0.0
        %389 = vmatprep.subr.mxu0 0.0
        %390 = vmatpush1.msra.mxu0 0.0
        %391 = vmatprep.subr.mxu0 0.0
        %392 = vmatpush1.msra.mxu0 0.0
        %393 = vmatprep.subr.mxu0 0.0
        %394 = vmatpush1.msra.mxu0 0.0
        %395 = vmatprep.subr.mxu0 0.0
        %396 = vmatpush1.msra.mxu0 0.0
        %397 = vmatprep.subr.mxu0 0.0
        %398 = vmatpush1.msra.mxu0 0.0
        %399 = vmatprep.subr.mxu0 0.0
        %400 = vmatpush1.msra.mxu0 0.0
        %401 = vmatprep.subr.mxu0 0.0
        %402 = vmatpush1.msra.mxu0 0.0
        %403 = vmatprep.subr.mxu0 0.0
        %404 = vmatpush1.msra.mxu0 0.0
        %405 = vmatprep.subr.mxu0 0.0
        %406 = vmatpush1.msra.mxu0 0.0
        %407 = vmatprep.subr.mxu0 0.0
        %408 = vmatpush1.msra.mxu0 0.0
        %409 = vmatprep.subr.mxu0 0.0
        %410 = vmatpush1.msra.mxu0 0.0
        %411 = vmatprep.subr.mxu0 0.0
        %412 = vmatpush1.msra.mxu0 0.0
        %413 = vmatprep.subr.mxu0 0.0
        %414 = vmatpush1.msra.mxu0 0.0
        %415 = vmatprep.subr.mxu0 0.0
        %416 = vmatpush1.msra.mxu0 0.0
        %417 = vmatprep.subr.mxu0 0.0
        %418 = vmatpush1.msra.mxu0 0.0
        %419 = vmatprep.subr.mxu0 0.0
        %420 = vmatpush1.msra.mxu0 0.0
        %421 = vmatprep.subr.mxu0 0.0
        %422 = vmatpush1.msra.mxu0 0.0
        %423 = vmatprep.subr.mxu0 0.0
        %424 = vmatpush1.msra.mxu0 0.0
        %425 = vmatprep.subr.mxu0 0.0
        %426 = vmatpush1.msra.mxu0 0.0
        %427 = vmatprep.mubr.f32.mxu0 0.0
        %428 = vmatmul.mubr.f32.gmra.mrb[0].mxu0 %v361
        %v429 = vpop.f32.mrb[0].mxu0
        %v430 = vadd.f32 %v342, %v429
        %v431 = vpop.f32.mrb[0].mxu0
        %432 = vdwg.mxu0
        %433 = vmatprep.subr.mxu0 0.0
        %434 = vmatpush1.msra.mxu0 %v319
        %435 = vmatprep.subr.mxu0 0.0
        %436 = vmatpush1.msra.mxu0 %v320
        %437 = vmatprep.subr.mxu0 0.0
        %438 = vmatpush1.msra.mxu0 %v321
        %439 = vmatprep.subr.mxu0 0.0
        %440 = vmatpush1.msra.mxu0 %v322
        %441 = vmatprep.subr.mxu0 0.0
        %442 = vmatpush1.msra.mxu0 0.0
        %443 = vmatprep.subr.mxu0 0.0
        %444 = vmatpush1.msra.mxu0 0.0
        %445 = vmatprep.subr.mxu0 0.0
        %446 = vmatpush1.msra.mxu0 0.0
        %447 = vmatprep.subr.mxu0 0.0
        %448 = vmatpush1.msra.mxu0 0.0
        %449 = vmatprep.subr.mxu0 0.0
        %450 = vmatpush1.msra.mxu0 0.0
        %451 = vmatprep.subr.mxu0 0.0
        %452 = vmatpush1.msra.mxu0 0.0
        %453 = vmatprep.subr.mxu0 0.0
        %454 = vmatpush1.msra.mxu0 0.0
        %455 = vmatprep.subr.mxu0 0.0
        %456 = vmatpush1.msra.mxu0 0.0
        %457 = vmatprep.subr.mxu0 0.0
        %458 = vmatpush1.msra.mxu0 0.0
        %459 = vmatprep.subr.mxu0 0.0
        %460 = vmatpush1.msra.mxu0 0.0
        %461 = vmatprep.subr.mxu0 0.0
        %462 = vmatpush1.msra.mxu0 0.0
        %463 = vmatprep.subr.mxu0 0.0
        %464 = vmatpush1.msra.mxu0 0.0
        %465 = vmatprep.subr.mxu0 0.0
        %466 = vmatpush1.msra.mxu0 0.0
        %467 = vmatprep.subr.mxu0 0.0
        %468 = vmatpush1.msra.mxu0 0.0
        %469 = vmatprep.subr.mxu0 0.0
        %470 = vmatpush1.msra.mxu0 0.0
        %471 = vmatprep.subr.mxu0 0.0
        %472 = vmatpush1.msra.mxu0 0.0
        %473 = vmatprep.subr.mxu0 0.0
        %474 = vmatpush1.msra.mxu0 0.0
        %475 = vmatprep.subr.mxu0 0.0
        %476 = vmatpush1.msra.mxu0 0.0
        %477 = vmatprep.subr.mxu0 0.0
        %478 = vmatpush1.msra.mxu0 0.0
        %479 = vmatprep.subr.mxu0 0.0
        %480 = vmatpush1.msra.mxu0 0.0
        %481 = vmatprep.subr.mxu0 0.0
        %482 = vmatpush1.msra.mxu0 0.0
        %483 = vmatprep.subr.mxu0 0.0
        %484 = vmatpush1.msra.mxu0 0.0
        %485 = vmatprep.subr.mxu0 0.0
        %486 = vmatpush1.msra.mxu0 0.0
        %487 = vmatprep.subr.mxu0 0.0
        %488 = vmatpush1.msra.mxu0 0.0
        %489 = vmatprep.subr.mxu0 0.0
        %490 = vmatpush1.msra.mxu0 0.0
        %491 = vmatprep.subr.mxu0 0.0
        %492 = vmatpush1.msra.mxu0 0.0
        %493 = vmatprep.subr.mxu0 0.0
        %494 = vmatpush1.msra.mxu0 0.0
        %495 = vmatprep.subr.mxu0 0.0
        %496 = vmatpush1.msra.mxu0 0.0
        %497 = vmatprep.mubr.f32.mxu0 0.0
        %498 = vmatmul.mubr.f32.gmra.mrb[0].mxu0 %v361
        %v499 = vpop.f32.mrb[0].mxu0
        %v500 = vadd.f32 %v346, %v499
        %v501 = vpop.f32.mrb[0].mxu0
        %502 = vdwg.mxu0
        %503 = vmatprep.subr.mxu0 0.0
        %504 = vmatpush1.msra.mxu0 %v323
        %505 = vmatprep.subr.mxu0 0.0
        %506 = vmatpush1.msra.mxu0 %v324
        %507 = vmatprep.subr.mxu0 0.0
        %508 = vmatpush1.msra.mxu0 %v325
        %509 = vmatprep.subr.mxu0 0.0
        %510 = vmatpush1.msra.mxu0 %v326
        %511 = vmatprep.subr.mxu0 0.0
        %512 = vmatpush1.msra.mxu0 0.0
        %513 = vmatprep.subr.mxu0 0.0
        %514 = vmatpush1.msra.mxu0 0.0
        %515 = vmatprep.subr.mxu0 0.0
        %516 = vmatpush1.msra.mxu0 0.0
        %517 = vmatprep.subr.mxu0 0.0
        %518 = vmatpush1.msra.mxu0 0.0
        %519 = vmatprep.subr.mxu0 0.0
        %520 = vmatpush1.msra.mxu0 0.0
        %521 = vmatprep.subr.mxu0 0.0
        %522 = vmatpush1.msra.mxu0 0.0
        %523 = vmatprep.subr.mxu0 0.0
        %524 = vmatpush1.msra.mxu0 0.0
        %525 = vmatprep.subr.mxu0 0.0
        %526 = vmatpush1.msra.mxu0 0.0
        %527 = vmatprep.subr.mxu0 0.0
        %528 = vmatpush1.msra.mxu0 0.0
        %529 = vmatprep.subr.mxu0 0.0
        %530 = vmatpush1.msra.mxu0 0.0
        %531 = vmatprep.subr.mxu0 0.0
        %532 = vmatpush1.msra.mxu0 0.0
        %533 = vmatprep.subr.mxu0 0.0
        %534 = vmatpush1.msra.mxu0 0.0
        %535 = vmatprep.subr.mxu0 0.0
        %536 = vmatpush1.msra.mxu0 0.0
        %537 = vmatprep.subr.mxu0 0.0
        %538 = vmatpush1.msra.mxu0 0.0
        %539 = vmatprep.subr.mxu0 0.0
        %540 = vmatpush1.msra.mxu0 0.0
        %541 = vmatprep.subr.mxu0 0.0
        %542 = vmatpush1.msra.mxu0 0.0
        %543 = vmatprep.subr.mxu0 0.0
        %544 = vmatpush1.msra.mxu0 0.0
        %545 = vmatprep.subr.mxu0 0.0
        %546 = vmatpush1.msra.mxu0 0.0
        %547 = vmatprep.subr.mxu0 0.0
        %548 = vmatpush1.msra.mxu0 0.0
        %549 = vmatprep.subr.mxu0 0.0
        %550 = vmatpush1.msra.mxu0 0.0
        %551 = vmatprep.subr.mxu0 0.0
        %552 = vmatpush1.msra.mxu0 0.0
        %553 = vmatprep.subr.mxu0 0.0
        %554 = vmatpush1.msra.mxu0 0.0
        %555 = vmatprep.subr.mxu0 0.0
        %556 = vmatpush1.msra.mxu0 0.0
        %557 = vmatprep.subr.mxu0 0.0
        %558 = vmatpush1.msra.mxu0 0.0
        %559 = vmatprep.subr.mxu0 0.0
        %560 = vmatpush1.msra.mxu0 0.0
        %561 = vmatprep.subr.mxu0 0.0
        %562 = vmatpush1.msra.mxu0 0.0
        %563 = vmatprep.subr.mxu0 0.0
        %564 = vmatpush1.msra.mxu0 0.0
        %565 = vmatprep.subr.mxu0 0.0
        %566 = vmatpush1.msra.mxu0 0.0
        %567 = vmatprep.mubr.f32.mxu0 0.0
        %568 = vmatmul.mubr.f32.gmra.mrb[0].mxu0 %v361
        %v569 = vpop.f32.mrb[0].mxu0
        %v570 = vadd.f32 %v350, %v569
        %v571 = vpop.f32.mrb[0].mxu0
        %572 = vdwg.mxu0
        %573 = vmatprep.subr.mxu0 0.0
        %574 = vmatpush1.msra.mxu0 %v327
        %575 = vmatprep.subr.mxu0 0.0
        %576 = vmatpush1.msra.mxu0 %v328
        %577 = vmatprep.subr.mxu0 0.0
        %578 = vmatpush1.msra.mxu0 %v329
        %579 = vmatprep.subr.mxu0 0.0
        %580 = vmatpush1.msra.mxu0 %v330
        %581 = vmatprep.subr.mxu0 0.0
        %582 = vmatpush1.msra.mxu0 0.0
        %583 = vmatprep.subr.mxu0 0.0
        %584 = vmatpush1.msra.mxu0 0.0
        %585 = vmatprep.subr.mxu0 0.0
        %586 = vmatpush1.msra.mxu0 0.0
        %587 = vmatprep.subr.mxu0 0.0
        %588 = vmatpush1.msra.mxu0 0.0
        %589 = vmatprep.subr.mxu0 0.0
        %590 = vmatpush1.msra.mxu0 0.0
        %591 = vmatprep.subr.mxu0 0.0
        %592 = vmatpush1.msra.mxu0 0.0
        %593 = vmatprep.subr.mxu0 0.0
        %594 = vmatpush1.msra.mxu0 0.0
        %595 = vmatprep.subr.mxu0 0.0
        %596 = vmatpush1.msra.mxu0 0.0
        %597 = vmatprep.subr.mxu0 0.0
        %598 = vmatpush1.msra.mxu0 0.0
        %599 = vmatprep.subr.mxu0 0.0
        %600 = vmatpush1.msra.mxu0 0.0
        %601 = vmatprep.subr.mxu0 0.0
        %602 = vmatpush1.msra.mxu0 0.0
        %603 = vmatprep.subr.mxu0 0.0
        %604 = vmatpush1.msra.mxu0 0.0
        %605 = vmatprep.subr.mxu0 0.0
        %606 = vmatpush1.msra.mxu0 0.0
        %607 = vmatprep.subr.mxu0 0.0
        %608 = vmatpush1.msra.mxu0 0.0
        %609 = vmatprep.subr.mxu0 0.0
        %610 = vmatpush1.msra.mxu0 0.0
        %611 = vmatprep.subr.mxu0 0.0
        %612 = vmatpush1.msra.mxu0 0.0
        %613 = vmatprep.subr.mxu0 0.0
        %614 = vmatpush1.msra.mxu0 0.0
        %615 = vmatprep.subr.mxu0 0.0
        %616 = vmatpush1.msra.mxu0 0.0
        %617 = vmatprep.subr.mxu0 0.0
        %618 = vmatpush1.msra.mxu0 0.0
        %619 = vmatprep.subr.mxu0 0.0
        %620 = vmatpush1.msra.mxu0 0.0
        %621 = vmatprep.subr.mxu0 0.0
        %622 = vmatpush1.msra.mxu0 0.0
        %623 = vmatprep.subr.mxu0 0.0
        %624 = vmatpush1.msra.mxu0 0.0
        %625 = vmatprep.subr.mxu0 0.0
        %626 = vmatpush1.msra.mxu0 0.0
        %627 = vmatprep.subr.mxu0 0.0
        %628 = vmatpush1.msra.mxu0 0.0
        %629 = vmatprep.subr.mxu0 0.0
        %630 = vmatpush1.msra.mxu0 0.0
        %631 = vmatprep.subr.mxu0 0.0
        %632 = vmatpush1.msra.mxu0 0.0
        %633 = vmatprep.subr.mxu0 0.0
        %634 = vmatpush1.msra.mxu0 0.0
        %635 = vmatprep.subr.mxu0 0.0
        %636 = vmatpush1.msra.mxu0 0.0
        %637 = vmatprep.mubr.f32.mxu0 0.0
        %638 = vmatmul.mubr.f32.gmra.mrb[0].mxu0 %v361
        %v639 = vpop.f32.mrb[0].mxu0
        %v640 = vadd.f32 %v354, %v639
        %v641 = vpop.f32.mrb[0].mxu0
        %642 = vdwg.mxu0
        %647 = vrot.lane.b32.xlu0 %v430, 120
        %v648 = vpop.permute.xlu0 %647
        %649 = vrot.lane.b32.xlu0 %v500, 120
        %v650 = vpop.permute.xlu0 %649
        %651 = vrot.lane.b32.xlu0 %v570, 120
        %v652 = vpop.permute.xlu0 %651
        %653 = vrot.lane.b32.xlu0 %v640, 120
        %v654 = vpop.permute.xlu0 %653
        %s659 = scalar_lea.vmem [#allocation2], %s313
        %vm660 = vcmask 64512
        %661 = vst.msk [vmem:[%s659] sm:$0xff] %vm660, %v648
        %662 = vst.msk [vmem:[%s659 + $0x8] sm:$0xff] %vm660, %v650
        %663 = vst.msk [vmem:[%s659 + $0x10] sm:$0xff] %vm660, %v652
        %664 = vst.msk [vmem:[%s659 + $0x18] sm:$0xff] %vm660, %v654
        %665 = vrot.lane.b32.xlu0 %v430, 112
        %v666 = vpop.permute.xlu0 %665
        %667 = vrot.lane.b32.xlu0 %v500, 112
        %v668 = vpop.permute.xlu0 %667
        %669 = vrot.lane.b32.xlu0 %v570, 112
        %v670 = vpop.permute.xlu0 %669
        %671 = vrot.lane.b32.xlu0 %v640, 112
        %v672 = vpop.permute.xlu0 %671
        %s677 = scalar_lea.vmem [#allocation3], %s313
        %678 = vst.msk [vmem:[%s677] sm:$0xff] %vm660, %v666
        %679 = vst.msk [vmem:[%s677 + $0x8] sm:$0xff] %vm660, %v668
        %680 = vst.msk [vmem:[%s677 + $0x10] sm:$0xff] %vm660, %v670
        %681 = vst.msk [vmem:[%s677 + $0x18] sm:$0xff] %vm660, %v672
        %v682 = vlaneseq
        %v683 = vshrl.u32 %v682, 7
        %v684 = vstv %s313
        %v685 = vadd.s32 %v684, %v683
        %s686 = sadd.s32 %s29, 1
        // While loop
        $region61: #{tpu_custom_call.1} parent=39 // loop_pre_header
          _
        $region62: #{tpu_custom_call.1} parent=39 // loop_header
          %s688 = sphi 0, %s690
          %p689 = scmp.ge.s32.totalorder %s688, %s686
          %v693 = vphi -1e+30, %v1039
          %v694 = vphi -1e+30, %v1040
          %v695 = vphi -1e+30, %v1041
          %v696 = vphi -1e+30, %v1042
          %v697 = vphi 0.0, %v1083
          %v698 = vphi 0.0, %v1084
          %v699 = vphi 0.0, %v1085
          %v700 = vphi 0.0, %v1086
          %v701 = vphi 0.0, %v1383
          %v702 = vphi 0.0, %v1384
          %v703 = vphi 0.0, %v1385
          %v704 = vphi 0.0, %v1386
        $region63: #{tpu_custom_call.1} parent=39 // loop_header_branch
          %692 = sbr.rel (%p689) target = $region67
        $region64: #{tpu_custom_call.1} parent=39 // loop_body
          %s705 = smul.u32 %s688, 8
          %s706 = scalar_lea.vmem [#allocation2], %s705
          %v707 = vld [vmem:[%s706] sm:$0xff]
          %v708 = vld [vmem:[%s706 + $0x8] sm:$0xff]
          %v709 = vld [vmem:[%s706 + $0x10] sm:$0xff]
          %v710 = vld [vmem:[%s706 + $0x18] sm:$0xff]
          %s711 = scalar_lea.vmem [#allocation3], %s705
          %v712 = vld [vmem:[%s711] sm:$0xff]
          %v713 = vld [vmem:[%s711 + $0x8] sm:$0xff]
          %v714 = vld [vmem:[%s711 + $0x10] sm:$0xff]
          %v715 = vld [vmem:[%s711 + $0x18] sm:$0xff]
          %v716 = vsel %vm660, %v430, 0
          %v719 = vsel %vm660, %v707, 0
          %721 = vmatprep.subr.mxu0 0.0
          %722 = vmatpush1.xpose.msra.mxu0 %v719
          %723 = vmatprep.subr.mxu0 0.0
          %724 = vmatpush1.xpose.msra.mxu0 0.0
          %725 = vmatprep.subr.mxu0 0.0
          %726 = vmatpush1.xpose.msra.mxu0 0.0
          %727 = vmatprep.subr.mxu0 0.0
          %728 = vmatpush1.xpose.msra.mxu0 0.0
          %729 = vmatprep.subr.mxu0 0.0
          %730 = vmatpush1.xpose.msra.mxu0 0.0
          %731 = vmatprep.subr.mxu0 0.0
          %732 = vmatpush1.xpose.msra.mxu0 0.0
          %733 = vmatprep.subr.mxu0 0.0
          %734 = vmatpush1.xpose.msra.mxu0 0.0
          %735 = vmatprep.subr.mxu0 0.0
          %736 = vmatpush1.xpose.msra.mxu0 0.0
          %737 = vmatprep.subr.mxu0 0.0
          %738 = vmatpush1.xpose.msra.mxu0 0.0
          %739 = vmatprep.subr.mxu0 0.0
          %740 = vmatpush1.xpose.msra.mxu0 0.0
          %741 = vmatprep.subr.mxu0 0.0
          %742 = vmatpush1.xpose.msra.mxu0 0.0
          %743 = vmatprep.subr.mxu0 0.0
          %744 = vmatpush1.xpose.msra.mxu0 0.0
          %745 = vmatprep.subr.mxu0 0.0
          %746 = vmatpush1.xpose.msra.mxu0 0.0
          %747 = vmatprep.subr.mxu0 0.0
          %748 = vmatpush1.xpose.msra.mxu0 0.0
          %749 = vmatprep.subr.mxu0 0.0
          %750 = vmatpush1.xpose.msra.mxu0 0.0
          %751 = vmatprep.subr.mxu0 0.0
          %752 = vmatpush1.xpose.msra.mxu0 0.0
          %753 = vmatprep.subr.mxu0 0.0
          %754 = vmatpush1.xpose.msra.mxu0 0.0
          %755 = vmatprep.subr.mxu0 0.0
          %756 = vmatpush1.xpose.msra.mxu0 0.0
          %757 = vmatprep.subr.mxu0 0.0
          %758 = vmatpush1.xpose.msra.mxu0 0.0
          %759 = vmatprep.subr.mxu0 0.0
          %760 = vmatpush1.xpose.msra.mxu0 0.0
          %761 = vmatprep.subr.mxu0 0.0
          %762 = vmatpush1.xpose.msra.mxu0 0.0
          %763 = vmatprep.subr.mxu0 0.0
          %764 = vmatpush1.xpose.msra.mxu0 0.0
          %765 = vmatprep.subr.mxu0 0.0
          %766 = vmatpush1.xpose.msra.mxu0 0.0
          %767 = vmatprep.subr.mxu0 0.0
          %768 = vmatpush1.xpose.msra.mxu0 0.0
          %769 = vmatprep.subr.mxu0 0.0
          %770 = vmatpush1.xpose.msra.mxu0 0.0
          %771 = vmatprep.subr.mxu0 0.0
          %772 = vmatpush1.xpose.msra.mxu0 0.0
          %773 = vmatprep.subr.mxu0 0.0
          %774 = vmatpush1.xpose.msra.mxu0 0.0
          %775 = vmatprep.subr.mxu0 0.0
          %776 = vmatpush1.xpose.msra.mxu0 0.0
          %777 = vmatprep.subr.mxu0 0.0
          %778 = vmatpush1.xpose.msra.mxu0 0.0
          %779 = vmatprep.subr.mxu0 0.0
          %780 = vmatpush1.xpose.msra.mxu0 0.0
          %781 = vmatprep.subr.mxu0 0.0
          %782 = vmatpush1.xpose.msra.mxu0 0.0
          %783 = vmatprep.subr.mxu0 0.0
          %784 = vmatpush1.xpose.msra.mxu0 0.0
          %785 = vmatprep.mubr.f32.mxu0 0.0
          %786 = vmatmul.mubr.f32.gmra.mrb[0].mxu0 %v716
          %v787 = vpop.f32.mrb[0].mxu0
          %v788 = vadd.f32 0.0, %v787
          %v789 = vpop.f32.mrb[0].mxu0
          %790 = vdwg.mxu0
          %v791 = vsel %vm660, %v500, 0
          %v794 = vsel %vm660, %v708, 0
          %796 = vmatprep.subr.mxu0 0.0
          %797 = vmatpush1.xpose.msra.mxu0 %v794
          %798 = vmatprep.subr.mxu0 0.0
          %799 = vmatpush1.xpose.msra.mxu0 0.0
          %800 = vmatprep.subr.mxu0 0.0
          %801 = vmatpush1.xpose.msra.mxu0 0.0
          %802 = vmatprep.subr.mxu0 0.0
          %803 = vmatpush1.xpose.msra.mxu0 0.0
          %804 = vmatprep.subr.mxu0 0.0
          %805 = vmatpush1.xpose.msra.mxu0 0.0
          %806 = vmatprep.subr.mxu0 0.0
          %807 = vmatpush1.xpose.msra.mxu0 0.0
          %808 = vmatprep.subr.mxu0 0.0
          %809 = vmatpush1.xpose.msra.mxu0 0.0
          %810 = vmatprep.subr.mxu0 0.0
          %811 = vmatpush1.xpose.msra.mxu0 0.0
          %812 = vmatprep.subr.mxu0 0.0
          %813 = vmatpush1.xpose.msra.mxu0 0.0
          %814 = vmatprep.subr.mxu0 0.0
          %815 = vmatpush1.xpose.msra.mxu0 0.0
          %816 = vmatprep.subr.mxu0 0.0
          %817 = vmatpush1.xpose.msra.mxu0 0.0
          %818 = vmatprep.subr.mxu0 0.0
          %819 = vmatpush1.xpose.msra.mxu0 0.0
          %820 = vmatprep.subr.mxu0 0.0
          %821 = vmatpush1.xpose.msra.mxu0 0.0
          %822 = vmatprep.subr.mxu0 0.0
          %823 = vmatpush1.xpose.msra.mxu0 0.0
          %824 = vmatprep.subr.mxu0 0.0
          %825 = vmatpush1.xpose.msra.mxu0 0.0
          %826 = vmatprep.subr.mxu0 0.0
          %827 = vmatpush1.xpose.msra.mxu0 0.0
          %828 = vmatprep.subr.mxu0 0.0
          %829 = vmatpush1.xpose.msra.mxu0 0.0
          %830 = vmatprep.subr.mxu0 0.0
          %831 = vmatpush1.xpose.msra.mxu0 0.0
          %832 = vmatprep.subr.mxu0 0.0
          %833 = vmatpush1.xpose.msra.mxu0 0.0
          %834 = vmatprep.subr.mxu0 0.0
          %835 = vmatpush1.xpose.msra.mxu0 0.0
          %836 = vmatprep.subr.mxu0 0.0
          %837 = vmatpush1.xpose.msra.mxu0 0.0
          %838 = vmatprep.subr.mxu0 0.0
          %839 = vmatpush1.xpose.msra.mxu0 0.0
          %840 = vmatprep.subr.mxu0 0.0
          %841 = vmatpush1.xpose.msra.mxu0 0.0
          %842 = vmatprep.subr.mxu0 0.0
          %843 = vmatpush1.xpose.msra.mxu0 0.0
          %844 = vmatprep.subr.mxu0 0.0
          %845 = vmatpush1.xpose.msra.mxu0 0.0
          %846 = vmatprep.subr.mxu0 0.0
          %847 = vmatpush1.xpose.msra.mxu0 0.0
          %848 = vmatprep.subr.mxu0 0.0
          %849 = vmatpush1.xpose.msra.mxu0 0.0
          %850 = vmatprep.subr.mxu0 0.0
          %851 = vmatpush1.xpose.msra.mxu0 0.0
          %852 = vmatprep.subr.mxu0 0.0
          %853 = vmatpush1.xpose.msra.mxu0 0.0
          %854 = vmatprep.subr.mxu0 0.0
          %855 = vmatpush1.xpose.msra.mxu0 0.0
          %856 = vmatprep.subr.mxu0 0.0
          %857 = vmatpush1.xpose.msra.mxu0 0.0
          %858 = vmatprep.subr.mxu0 0.0
          %859 = vmatpush1.xpose.msra.mxu0 0.0
          %860 = vmatprep.mubr.f32.mxu0 0.0
          %861 = vmatmul.mubr.f32.gmra.mrb[0].mxu0 %v791
          %v862 = vpop.f32.mrb[0].mxu0
          %v863 = vadd.f32 0.0, %v862
          %v864 = vpop.f32.mrb[0].mxu0
          %865 = vdwg.mxu0
          %v866 = vsel %vm660, %v570, 0
          %v869 = vsel %vm660, %v709, 0
          %871 = vmatprep.subr.mxu0 0.0
          %872 = vmatpush1.xpose.msra.mxu0 %v869
          %873 = vmatprep.subr.mxu0 0.0
          %874 = vmatpush1.xpose.msra.mxu0 0.0
          %875 = vmatprep.subr.mxu0 0.0
          %876 = vmatpush1.xpose.msra.mxu0 0.0
          %877 = vmatprep.subr.mxu0 0.0
          %878 = vmatpush1.xpose.msra.mxu0 0.0
          %879 = vmatprep.subr.mxu0 0.0
          %880 = vmatpush1.xpose.msra.mxu0 0.0
          %881 = vmatprep.subr.mxu0 0.0
          %882 = vmatpush1.xpose.msra.mxu0 0.0
          %883 = vmatprep.subr.mxu0 0.0
          %884 = vmatpush1.xpose.msra.mxu0 0.0
          %885 = vmatprep.subr.mxu0 0.0
          %886 = vmatpush1.xpose.msra.mxu0 0.0
          %887 = vmatprep.subr.mxu0 0.0
          %888 = vmatpush1.xpose.msra.mxu0 0.0
          %889 = vmatprep.subr.mxu0 0.0
          %890 = vmatpush1.xpose.msra.mxu0 0.0
          %891 = vmatprep.subr.mxu0 0.0
          %892 = vmatpush1.xpose.msra.mxu0 0.0
          %893 = vmatprep.subr.mxu0 0.0
          %894 = vmatpush1.xpose.msra.mxu0 0.0
          %895 = vmatprep.subr.mxu0 0.0
          %896 = vmatpush1.xpose.msra.mxu0 0.0
          %897 = vmatprep.subr.mxu0 0.0
          %898 = vmatpush1.xpose.msra.mxu0 0.0
          %899 = vmatprep.subr.mxu0 0.0
          %900 = vmatpush1.xpose.msra.mxu0 0.0
          %901 = vmatprep.subr.mxu0 0.0
          %902 = vmatpush1.xpose.msra.mxu0 0.0
          %903 = vmatprep.subr.mxu0 0.0
          %904 = vmatpush1.xpose.msra.mxu0 0.0
          %905 = vmatprep.subr.mxu0 0.0
          %906 = vmatpush1.xpose.msra.mxu0 0.0
          %907 = vmatprep.subr.mxu0 0.0
          %908 = vmatpush1.xpose.msra.mxu0 0.0
          %909 = vmatprep.subr.mxu0 0.0
          %910 = vmatpush1.xpose.msra.mxu0 0.0
          %911 = vmatprep.subr.mxu0 0.0
          %912 = vmatpush1.xpose.msra.mxu0 0.0
          %913 = vmatprep.subr.mxu0 0.0
          %914 = vmatpush1.xpose.msra.mxu0 0.0
          %915 = vmatprep.subr.mxu0 0.0
          %916 = vmatpush1.xpose.msra.mxu0 0.0
          %917 = vmatprep.subr.mxu0 0.0
          %918 = vmatpush1.xpose.msra.mxu0 0.0
          %919 = vmatprep.subr.mxu0 0.0
          %920 = vmatpush1.xpose.msra.mxu0 0.0
          %921 = vmatprep.subr.mxu0 0.0
          %922 = vmatpush1.xpose.msra.mxu0 0.0
          %923 = vmatprep.subr.mxu0 0.0
          %924 = vmatpush1.xpose.msra.mxu0 0.0
          %925 = vmatprep.subr.mxu0 0.0
          %926 = vmatpush1.xpose.msra.mxu0 0.0
          %927 = vmatprep.subr.mxu0 0.0
          %928 = vmatpush1.xpose.msra.mxu0 0.0
          %929 = vmatprep.subr.mxu0 0.0
          %930 = vmatpush1.xpose.msra.mxu0 0.0
          %931 = vmatprep.subr.mxu0 0.0
          %932 = vmatpush1.xpose.msra.mxu0 0.0
          %933 = vmatprep.subr.mxu0 0.0
          %934 = vmatpush1.xpose.msra.mxu0 0.0
          %935 = vmatprep.mubr.f32.mxu0 0.0
          %936 = vmatmul.mubr.f32.gmra.mrb[0].mxu0 %v866
          %v937 = vpop.f32.mrb[0].mxu0
          %v938 = vadd.f32 0.0, %v937
          %v939 = vpop.f32.mrb[0].mxu0
          %940 = vdwg.mxu0
          %v941 = vsel %vm660, %v640, 0
          %v944 = vsel %vm660, %v710, 0
          %946 = vmatprep.subr.mxu0 0.0
          %947 = vmatpush1.xpose.msra.mxu0 %v944
          %948 = vmatprep.subr.mxu0 0.0
          %949 = vmatpush1.xpose.msra.mxu0 0.0
          %950 = vmatprep.subr.mxu0 0.0
          %951 = vmatpush1.xpose.msra.mxu0 0.0
          %952 = vmatprep.subr.mxu0 0.0
          %953 = vmatpush1.xpose.msra.mxu0 0.0
          %954 = vmatprep.subr.mxu0 0.0
          %955 = vmatpush1.xpose.msra.mxu0 0.0
          %956 = vmatprep.subr.mxu0 0.0
          %957 = vmatpush1.xpose.msra.mxu0 0.0
          %958 = vmatprep.subr.mxu0 0.0
          %959 = vmatpush1.xpose.msra.mxu0 0.0
          %960 = vmatprep.subr.mxu0 0.0
          %961 = vmatpush1.xpose.msra.mxu0 0.0
          %962 = vmatprep.subr.mxu0 0.0
          %963 = vmatpush1.xpose.msra.mxu0 0.0
          %964 = vmatprep.subr.mxu0 0.0
          %965 = vmatpush1.xpose.msra.mxu0 0.0
          %966 = vmatprep.subr.mxu0 0.0
          %967 = vmatpush1.xpose.msra.mxu0 0.0
          %968 = vmatprep.subr.mxu0 0.0
          %969 = vmatpush1.xpose.msra.mxu0 0.0
          %970 = vmatprep.subr.mxu0 0.0
          %971 = vmatpush1.xpose.msra.mxu0 0.0
          %972 = vmatprep.subr.mxu0 0.0
          %973 = vmatpush1.xpose.msra.mxu0 0.0
          %974 = vmatprep.subr.mxu0 0.0
          %975 = vmatpush1.xpose.msra.mxu0 0.0
          %976 = vmatprep.subr.mxu0 0.0
          %977 = vmatpush1.xpose.msra.mxu0 0.0
          %978 = vmatprep.subr.mxu0 0.0
          %979 = vmatpush1.xpose.msra.mxu0 0.0
          %980 = vmatprep.subr.mxu0 0.0
          %981 = vmatpush1.xpose.msra.mxu0 0.0
          %982 = vmatprep.subr.mxu0 0.0
          %983 = vmatpush1.xpose.msra.mxu0 0.0
          %984 = vmatprep.subr.mxu0 0.0
          %985 = vmatpush1.xpose.msra.mxu0 0.0
          %986 = vmatprep.subr.mxu0 0.0
          %987 = vmatpush1.xpose.msra.mxu0 0.0
          %988 = vmatprep.subr.mxu0 0.0
          %989 = vmatpush1.xpose.msra.mxu0 0.0
          %990 = vmatprep.subr.mxu0 0.0
          %991 = vmatpush1.xpose.msra.mxu0 0.0
          %992 = vmatprep.subr.mxu0 0.0
          %993 = vmatpush1.xpose.msra.mxu0 0.0
          %994 = vmatprep.subr.mxu0 0.0
          %995 = vmatpush1.xpose.msra.mxu0 0.0
          %996 = vmatprep.subr.mxu0 0.0
          %997 = vmatpush1.xpose.msra.mxu0 0.0
          %998 = vmatprep.subr.mxu0 0.0
          %999 = vmatpush1.xpose.msra.mxu0 0.0
          %1000 = vmatprep.subr.mxu0 0.0
          %1001 = vmatpush1.xpose.msra.mxu0 0.0
          %1002 = vmatprep.subr.mxu0 0.0
          %1003 = vmatpush1.xpose.msra.mxu0 0.0
          %1004 = vmatprep.subr.mxu0 0.0
          %1005 = vmatpush1.xpose.msra.mxu0 0.0
          %1006 = vmatprep.subr.mxu0 0.0
          %1007 = vmatpush1.xpose.msra.mxu0 0.0
          %1008 = vmatprep.subr.mxu0 0.0
          %1009 = vmatpush1.xpose.msra.mxu0 0.0
          %1010 = vmatprep.mubr.f32.mxu0 0.0
          %1011 = vmatmul.mubr.f32.gmra.mrb[0].mxu0 %v941
          %v1012 = vpop.f32.mrb[0].mxu0
          %v1013 = vadd.f32 0.0, %v1012
          %v1014 = vpop.f32.mrb[0].mxu0
          %1015 = vdwg.mxu0
          %v1016 = vlaneseq
          %v1017 = vand.u32 %v1016, 127
          %v1018 = vstv %s705
          %v1019 = vadd.s32 %v1018, %v1017
          %vm1020 = vcmp.le.s32.totalorder %v1019, %v685
          %v1021 = vsel %vm1020, 1, 0
          %vm1022 = vcmp.eq.s32.totalorder %v1021, 1
          %v1023 = vsel %vm1022, %v788, -1e+30
          %v1024 = vsel %vm1022, %v863, -1e+30
          %v1025 = vsel %vm1022, %v938, -1e+30
          %v1026 = vsel %vm1022, %v1013, -1e+30
          %v1027 = vsel %vm660, %v1023, -inf
          %1028 = vmax.xlane.f32.xlu0 %v1027
          %v1029 = vpop.xlane.xlu0 %1028
          %v1030 = vsel %vm660, %v1024, -inf
          %1031 = vmax.xlane.f32.xlu0 %v1030
          %v1032 = vpop.xlane.xlu0 %1031
          %v1033 = vsel %vm660, %v1025, -inf
          %1034 = vmax.xlane.f32.xlu0 %v1033
          %v1035 = vpop.xlane.xlu0 %1034
          %v1036 = vsel %vm660, %v1026, -inf
          %1037 = vmax.xlane.f32.xlu0 %v1036
          %v1038 = vpop.xlane.xlu0 %1037
          %v1039 = vmax.f32 %v693, %v1029
          %v1040 = vmax.f32 %v694, %v1032
          %v1041 = vmax.f32 %v695, %v1035
          %v1042 = vmax.f32 %v696, %v1038
          %v1043 = vsub.f32 %v693, %v1039
          %v1044 = vsub.f32 %v694, %v1040
          %v1045 = vsub.f32 %v695, %v1041
          %v1046 = vsub.f32 %v696, %v1042
          %v1047 = vmul.f32 %v1043, 1.442695
          %v1048 = vpow.pop %v1047
          %v1049 = vmul.f32 %v1044, 1.442695
          %v1050 = vpow.pop %v1049
          %v1051 = vmul.f32 %v1045, 1.442695
          %v1052 = vpow.pop %v1051
          %v1053 = vmul.f32 %v1046, 1.442695
          %v1054 = vpow.pop %v1053
          %v1055 = vsub.f32 %v1023, %v1039
          %v1056 = vsub.f32 %v1024, %v1040
          %v1057 = vsub.f32 %v1025, %v1041
          %v1058 = vsub.f32 %v1026, %v1042
          %v1059 = vmul.f32 %v1055, 1.442695
          %v1060 = vpow.pop %v1059
          %v1061 = vmul.f32 %v1056, 1.442695
          %v1062 = vpow.pop %v1061
          %v1063 = vmul.f32 %v1057, 1.442695
          %v1064 = vpow.pop %v1063
          %v1065 = vmul.f32 %v1058, 1.442695
          %v1066 = vpow.pop %v1065
          %v1067 = vmul.f32 %v1048, %v697
          %v1068 = vmul.f32 %v1050, %v698
          %v1069 = vmul.f32 %v1052, %v699
          %v1070 = vmul.f32 %v1054, %v700
          %v1071 = vsel %vm660, %v1060, 0.0
          %1072 = vadd.xlane.f32.xlu0 %v1071
          %v1073 = vpop.xlane.xlu0 %1072
          %v1074 = vsel %vm660, %v1062, 0.0
          %1075 = vadd.xlane.f32.xlu0 %v1074
          %v1076 = vpop.xlane.xlu0 %1075
          %v1077 = vsel %vm660, %v1064, 0.0
          %1078 = vadd.xlane.f32.xlu0 %v1077
          %v1079 = vpop.xlane.xlu0 %1078
          %v1080 = vsel %vm660, %v1066, 0.0
          %1081 = vadd.xlane.f32.xlu0 %v1080
          %v1082 = vpop.xlane.xlu0 %1081
          %v1083 = vadd.f32 %v1067, %v1073
          %v1084 = vadd.f32 %v1068, %v1076
          %v1085 = vadd.f32 %v1069, %v1079
          %v1086 = vadd.f32 %v1070, %v1082
          %v1087 = vmul.f32 %v1048, %v701
          %v1088 = vmul.f32 %v1050, %v702
          %v1089 = vmul.f32 %v1052, %v703
          %v1090 = vmul.f32 %v1054, %v704
          %v1092 = vsel %vm660, %v1060, 0
          %1094 = vmatprep.subr.mxu0 0.0
          %1095 = vmatpush1.msra.mxu0 %v712
          %1096 = vmatprep.subr.mxu0 0.0
          %1097 = vmatpush1.msra.mxu0 0.0
          %1098 = vmatprep.subr.mxu0 0.0
          %1099 = vmatpush1.msra.mxu0 0.0
          %1100 = vmatprep.subr.mxu0 0.0
          %1101 = vmatpush1.msra.mxu0 0.0
          %1102 = vmatprep.subr.mxu0 0.0
          %1103 = vmatpush1.msra.mxu0 0.0
          %1104 = vmatprep.subr.mxu0 0.0
          %1105 = vmatpush1.msra.mxu0 0.0
          %1106 = vmatprep.subr.mxu0 0.0
          %1107 = vmatpush1.msra.mxu0 0.0
          %1108 = vmatprep.subr.mxu0 0.0
          %1109 = vmatpush1.msra.mxu0 0.0
          %1110 = vmatprep.subr.mxu0 0.0
          %1111 = vmatpush1.msra.mxu0 0.0
          %1112 = vmatprep.subr.mxu0 0.0
          %1113 = vmatpush1.msra.mxu0 0.0
          %1114 = vmatprep.subr.mxu0 0.0
          %1115 = vmatpush1.msra.mxu0 0.0
          %1116 = vmatprep.subr.mxu0 0.0
          %1117 = vmatpush1.msra.mxu0 0.0
          %1118 = vmatprep.subr.mxu0 0.0
          %1119 = vmatpush1.msra.mxu0 0.0
          %1120 = vmatprep.subr.mxu0 0.0
          %1121 = vmatpush1.msra.mxu0 0.0
          %1122 = vmatprep.subr.mxu0 0.0
          %1123 = vmatpush1.msra.mxu0 0.0
          %1124 = vmatprep.subr.mxu0 0.0
          %1125 = vmatpush1.msra.mxu0 0.0
          %1126 = vmatprep.subr.mxu0 0.0
          %1127 = vmatpush1.msra.mxu0 0.0
          %1128 = vmatprep.subr.mxu0 0.0
          %1129 = vmatpush1.msra.mxu0 0.0
          %1130 = vmatprep.subr.mxu0 0.0
          %1131 = vmatpush1.msra.mxu0 0.0
          %1132 = vmatprep.subr.mxu0 0.0
          %1133 = vmatpush1.msra.mxu0 0.0
          %1134 = vmatprep.subr.mxu0 0.0
          %1135 = vmatpush1.msra.mxu0 0.0
          %1136 = vmatprep.subr.mxu0 0.0
          %1137 = vmatpush1.msra.mxu0 0.0
          %1138 = vmatprep.subr.mxu0 0.0
          %1139 = vmatpush1.msra.mxu0 0.0
          %1140 = vmatprep.subr.mxu0 0.0
          %1141 = vmatpush1.msra.mxu0 0.0
          %1142 = vmatprep.subr.mxu0 0.0
          %1143 = vmatpush1.msra.mxu0 0.0
          %1144 = vmatprep.subr.mxu0 0.0
          %1145 = vmatpush1.msra.mxu0 0.0
          %1146 = vmatprep.subr.mxu0 0.0
          %1147 = vmatpush1.msra.mxu0 0.0
          %1148 = vmatprep.subr.mxu0 0.0
          %1149 = vmatpush1.msra.mxu0 0.0
          %1150 = vmatprep.subr.mxu0 0.0
          %1151 = vmatpush1.msra.mxu0 0.0
          %1152 = vmatprep.subr.mxu0 0.0
          %1153 = vmatpush1.msra.mxu0 0.0
          %1154 = vmatprep.subr.mxu0 0.0
          %1155 = vmatpush1.msra.mxu0 0.0
          %1156 = vmatprep.subr.mxu0 0.0
          %1157 = vmatpush1.msra.mxu0 0.0
          %1158 = vmatprep.mubr.f32.mxu0 0.0
          %1159 = vmatmul.mubr.f32.gmra.mrb[0].mxu0 %v1092
          %v1160 = vpop.f32.mrb[0].mxu0
          %v1161 = vadd.f32 0.0, %v1160
          %v1162 = vpop.f32.mrb[0].mxu0
          %1163 = vdwg.mxu0
          %v1165 = vsel %vm660, %v1062, 0
          %1167 = vmatprep.subr.mxu0 0.0
          %1168 = vmatpush1.msra.mxu0 %v713
          %1169 = vmatprep.subr.mxu0 0.0
          %1170 = vmatpush1.msra.mxu0 0.0
          %1171 = vmatprep.subr.mxu0 0.0
          %1172 = vmatpush1.msra.mxu0 0.0
          %1173 = vmatprep.subr.mxu0 0.0
          %1174 = vmatpush1.msra.mxu0 0.0
          %1175 = vmatprep.subr.mxu0 0.0
          %1176 = vmatpush1.msra.mxu0 0.0
          %1177 = vmatprep.subr.mxu0 0.0
          %1178 = vmatpush1.msra.mxu0 0.0
          %1179 = vmatprep.subr.mxu0 0.0
          %1180 = vmatpush1.msra.mxu0 0.0
          %1181 = vmatprep.subr.mxu0 0.0
          %1182 = vmatpush1.msra.mxu0 0.0
          %1183 = vmatprep.subr.mxu0 0.0
          %1184 = vmatpush1.msra.mxu0 0.0
          %1185 = vmatprep.subr.mxu0 0.0
          %1186 = vmatpush1.msra.mxu0 0.0
          %1187 = vmatprep.subr.mxu0 0.0
          %1188 = vmatpush1.msra.mxu0 0.0
          %1189 = vmatprep.subr.mxu0 0.0
          %1190 = vmatpush1.msra.mxu0 0.0
          %1191 = vmatprep.subr.mxu0 0.0
          %1192 = vmatpush1.msra.mxu0 0.0
          %1193 = vmatprep.subr.mxu0 0.0
          %1194 = vmatpush1.msra.mxu0 0.0
          %1195 = vmatprep.subr.mxu0 0.0
          %1196 = vmatpush1.msra.mxu0 0.0
          %1197 = vmatprep.subr.mxu0 0.0
          %1198 = vmatpush1.msra.mxu0 0.0
          %1199 = vmatprep.subr.mxu0 0.0
          %1200 = vmatpush1.msra.mxu0 0.0
          %1201 = vmatprep.subr.mxu0 0.0
          %1202 = vmatpush1.msra.mxu0 0.0
          %1203 = vmatprep.subr.mxu0 0.0
          %1204 = vmatpush1.msra.mxu0 0.0
          %1205 = vmatprep.subr.mxu0 0.0
          %1206 = vmatpush1.msra.mxu0 0.0
          %1207 = vmatprep.subr.mxu0 0.0
          %1208 = vmatpush1.msra.mxu0 0.0
          %1209 = vmatprep.subr.mxu0 0.0
          %1210 = vmatpush1.msra.mxu0 0.0
          %1211 = vmatprep.subr.mxu0 0.0
          %1212 = vmatpush1.msra.mxu0 0.0
          %1213 = vmatprep.subr.mxu0 0.0
          %1214 = vmatpush1.msra.mxu0 0.0
          %1215 = vmatprep.subr.mxu0 0.0
          %1216 = vmatpush1.msra.mxu0 0.0
          %1217 = vmatprep.subr.mxu0 0.0
          %1218 = vmatpush1.msra.mxu0 0.0
          %1219 = vmatprep.subr.mxu0 0.0
          %1220 = vmatpush1.msra.mxu0 0.0
          %1221 = vmatprep.subr.mxu0 0.0
          %1222 = vmatpush1.msra.mxu0 0.0
          %1223 = vmatprep.subr.mxu0 0.0
          %1224 = vmatpush1.msra.mxu0 0.0
          %1225 = vmatprep.subr.mxu0 0.0
          %1226 = vmatpush1.msra.mxu0 0.0
          %1227 = vmatprep.subr.mxu0 0.0
          %1228 = vmatpush1.msra.mxu0 0.0
          %1229 = vmatprep.subr.mxu0 0.0
          %1230 = vmatpush1.msra.mxu0 0.0
          %1231 = vmatprep.mubr.f32.mxu0 0.0
          %1232 = vmatmul.mubr.f32.gmra.mrb[0].mxu0 %v1165
          %v1233 = vpop.f32.mrb[0].mxu0
          %v1234 = vadd.f32 0.0, %v1233
          %v1235 = vpop.f32.mrb[0].mxu0
          %1236 = vdwg.mxu0
          %v1238 = vsel %vm660, %v1064, 0
          %1240 = vmatprep.subr.mxu0 0.0
          %1241 = vmatpush1.msra.mxu0 %v714
          %1242 = vmatprep.subr.mxu0 0.0
          %1243 = vmatpush1.msra.mxu0 0.0
          %1244 = vmatprep.subr.mxu0 0.0
          %1245 = vmatpush1.msra.mxu0 0.0
          %1246 = vmatprep.subr.mxu0 0.0
          %1247 = vmatpush1.msra.mxu0 0.0
          %1248 = vmatprep.subr.mxu0 0.0
          %1249 = vmatpush1.msra.mxu0 0.0
          %1250 = vmatprep.subr.mxu0 0.0
          %1251 = vmatpush1.msra.mxu0 0.0
          %1252 = vmatprep.subr.mxu0 0.0
          %1253 = vmatpush1.msra.mxu0 0.0
          %1254 = vmatprep.subr.mxu0 0.0
          %1255 = vmatpush1.msra.mxu0 0.0
          %1256 = vmatprep.subr.mxu0 0.0
          %1257 = vmatpush1.msra.mxu0 0.0
          %1258 = vmatprep.subr.mxu0 0.0
          %1259 = vmatpush1.msra.mxu0 0.0
          %1260 = vmatprep.subr.mxu0 0.0
          %1261 = vmatpush1.msra.mxu0 0.0
          %1262 = vmatprep.subr.mxu0 0.0
          %1263 = vmatpush1.msra.mxu0 0.0
          %1264 = vmatprep.subr.mxu0 0.0
          %1265 = vmatpush1.msra.mxu0 0.0
          %1266 = vmatprep.subr.mxu0 0.0
          %1267 = vmatpush1.msra.mxu0 0.0
          %1268 = vmatprep.subr.mxu0 0.0
          %1269 = vmatpush1.msra.mxu0 0.0
          %1270 = vmatprep.subr.mxu0 0.0
          %1271 = vmatpush1.msra.mxu0 0.0
          %1272 = vmatprep.subr.mxu0 0.0
          %1273 = vmatpush1.msra.mxu0 0.0
          %1274 = vmatprep.subr.mxu0 0.0
          %1275 = vmatpush1.msra.mxu0 0.0
          %1276 = vmatprep.subr.mxu0 0.0
          %1277 = vmatpush1.msra.mxu0 0.0
          %1278 = vmatprep.subr.mxu0 0.0
          %1279 = vmatpush1.msra.mxu0 0.0
          %1280 = vmatprep.subr.mxu0 0.0
          %1281 = vmatpush1.msra.mxu0 0.0
          %1282 = vmatprep.subr.mxu0 0.0
          %1283 = vmatpush1.msra.mxu0 0.0
          %1284 = vmatprep.subr.mxu0 0.0
          %1285 = vmatpush1.msra.mxu0 0.0
          %1286 = vmatprep.subr.mxu0 0.0
          %1287 = vmatpush1.msra.mxu0 0.0
          %1288 = vmatprep.subr.mxu0 0.0
          %1289 = vmatpush1.msra.mxu0 0.0
          %1290 = vmatprep.subr.mxu0 0.0
          %1291 = vmatpush1.msra.mxu0 0.0
          %1292 = vmatprep.subr.mxu0 0.0
          %1293 = vmatpush1.msra.mxu0 0.0
          %1294 = vmatprep.subr.mxu0 0.0
          %1295 = vmatpush1.msra.mxu0 0.0
          %1296 = vmatprep.subr.mxu0 0.0
          %1297 = vmatpush1.msra.mxu0 0.0
          %1298 = vmatprep.subr.mxu0 0.0
          %1299 = vmatpush1.msra.mxu0 0.0
          %1300 = vmatprep.subr.mxu0 0.0
          %1301 = vmatpush1.msra.mxu0 0.0
          %1302 = vmatprep.subr.mxu0 0.0
          %1303 = vmatpush1.msra.mxu0 0.0
          %1304 = vmatprep.mubr.f32.mxu0 0.0
          %1305 = vmatmul.mubr.f32.gmra.mrb[0].mxu0 %v1238
          %v1306 = vpop.f32.mrb[0].mxu0
          %v1307 = vadd.f32 0.0, %v1306
          %v1308 = vpop.f32.mrb[0].mxu0
          %1309 = vdwg.mxu0
          %v1311 = vsel %vm660, %v1066, 0
          %1313 = vmatprep.subr.mxu0 0.0
          %1314 = vmatpush1.msra.mxu0 %v715
          %1315 = vmatprep.subr.mxu0 0.0
          %1316 = vmatpush1.msra.mxu0 0.0
          %1317 = vmatprep.subr.mxu0 0.0
          %1318 = vmatpush1.msra.mxu0 0.0
          %1319 = vmatprep.subr.mxu0 0.0
          %1320 = vmatpush1.msra.mxu0 0.0
          %1321 = vmatprep.subr.mxu0 0.0
          %1322 = vmatpush1.msra.mxu0 0.0
          %1323 = vmatprep.subr.mxu0 0.0
          %1324 = vmatpush1.msra.mxu0 0.0
          %1325 = vmatprep.subr.mxu0 0.0
          %1326 = vmatpush1.msra.mxu0 0.0
          %1327 = vmatprep.subr.mxu0 0.0
          %1328 = vmatpush1.msra.mxu0 0.0
          %1329 = vmatprep.subr.mxu0 0.0
          %1330 = vmatpush1.msra.mxu0 0.0
          %1331 = vmatprep.subr.mxu0 0.0
          %1332 = vmatpush1.msra.mxu0 0.0
          %1333 = vmatprep.subr.mxu0 0.0
          %1334 = vmatpush1.msra.mxu0 0.0
          %1335 = vmatprep.subr.mxu0 0.0
          %1336 = vmatpush1.msra.mxu0 0.0
          %1337 = vmatprep.subr.mxu0 0.0
          %1338 = vmatpush1.msra.mxu0 0.0
          %1339 = vmatprep.subr.mxu0 0.0
          %1340 = vmatpush1.msra.mxu0 0.0
          %1341 = vmatprep.subr.mxu0 0.0
          %1342 = vmatpush1.msra.mxu0 0.0
          %1343 = vmatprep.subr.mxu0 0.0
          %1344 = vmatpush1.msra.mxu0 0.0
          %1345 = vmatprep.subr.mxu0 0.0
          %1346 = vmatpush1.msra.mxu0 0.0
          %1347 = vmatprep.subr.mxu0 0.0
          %1348 = vmatpush1.msra.mxu0 0.0
          %1349 = vmatprep.subr.mxu0 0.0
          %1350 = vmatpush1.msra.mxu0 0.0
          %1351 = vmatprep.subr.mxu0 0.0
          %1352 = vmatpush1.msra.mxu0 0.0
          %1353 = vmatprep.subr.mxu0 0.0
          %1354 = vmatpush1.msra.mxu0 0.0
          %1355 = vmatprep.subr.mxu0 0.0
          %1356 = vmatpush1.msra.mxu0 0.0
          %1357 = vmatprep.subr.mxu0 0.0
          %1358 = vmatpush1.msra.mxu0 0.0
          %1359 = vmatprep.subr.mxu0 0.0
          %1360 = vmatpush1.msra.mxu0 0.0
          %1361 = vmatprep.subr.mxu0 0.0
          %1362 = vmatpush1.msra.mxu0 0.0
          %1363 = vmatprep.subr.mxu0 0.0
          %1364 = vmatpush1.msra.mxu0 0.0
          %1365 = vmatprep.subr.mxu0 0.0
          %1366 = vmatpush1.msra.mxu0 0.0
          %1367 = vmatprep.subr.mxu0 0.0
          %1368 = vmatpush1.msra.mxu0 0.0
          %1369 = vmatprep.subr.mxu0 0.0
          %1370 = vmatpush1.msra.mxu0 0.0
          %1371 = vmatprep.subr.mxu0 0.0
          %1372 = vmatpush1.msra.mxu0 0.0
          %1373 = vmatprep.subr.mxu0 0.0
          %1374 = vmatpush1.msra.mxu0 0.0
          %1375 = vmatprep.subr.mxu0 0.0
          %1376 = vmatpush1.msra.mxu0 0.0
          %1377 = vmatprep.mubr.f32.mxu0 0.0
          %1378 = vmatmul.mubr.f32.gmra.mrb[0].mxu0 %v1311
          %v1379 = vpop.f32.mrb[0].mxu0
          %v1380 = vadd.f32 0.0, %v1379
          %v1381 = vpop.f32.mrb[0].mxu0
          %1382 = vdwg.mxu0
          %v1383 = vadd.f32 %v1087, %v1161
          %v1384 = vadd.f32 %v1088, %v1234
          %v1385 = vadd.f32 %v1089, %v1307
          %v1386 = vadd.f32 %v1090, %v1380
        $region65: #{tpu_custom_call.1} parent=39 // loop_footer
          %s690 = sadd.s32 %s688, 1
        $region66: #{tpu_custom_call.1} parent=39 // loop_footer_branch
          %687 = sbr.rel target = $region62
        $region67: #{tpu_custom_call.1} parent=39 // loop_exit
          _
        %v1387 = vrcp.pop %v697
        %v1388 = vrcp.pop %v698
        %v1389 = vrcp.pop %v699
        %v1390 = vrcp.pop %v700
        %v1391 = vmul.f32 %v701, %v1387
        %v1392 = vmul.f32 %v702, %v1388
        %v1393 = vmul.f32 %v703, %v1389
        %v1394 = vmul.f32 %v704, %v1390
        %v1395 = vld [vmem:[#allocation10] sm:$0xff]
        %v1396 = vld [vmem:[#allocation10 + $0x8] sm:$0xff]
        %v1397 = vld [vmem:[#allocation10 + $0x10] sm:$0xff]
        %v1398 = vld [vmem:[#allocation10 + $0x18] sm:$0xff]
        %v1400 = vsel %vm660, %v1391, 0
        %1402 = vmatprep.subr.mxu0 0.0
        %1403 = vmatpush1.msra.mxu0 %v1395
        %1404 = vmatprep.subr.mxu0 0.0
        %1405 = vmatpush1.msra.mxu0 0.0
        %1406 = vmatprep.subr.mxu0 0.0
        %1407 = vmatpush1.msra.mxu0 0.0
        %1408 = vmatprep.subr.mxu0 0.0
        %1409 = vmatpush1.msra.mxu0 0.0
        %1410 = vmatprep.subr.mxu0 0.0
        %1411 = vmatpush1.msra.mxu0 0.0
        %1412 = vmatprep.subr.mxu0 0.0
        %1413 = vmatpush1.msra.mxu0 0.0
        %1414 = vmatprep.subr.mxu0 0.0
        %1415 = vmatpush1.msra.mxu0 0.0
        %1416 = vmatprep.subr.mxu0 0.0
        %1417 = vmatpush1.msra.mxu0 0.0
        %1418 = vmatprep.subr.mxu0 0.0
        %1419 = vmatpush1.msra.mxu0 0.0
        %1420 = vmatprep.subr.mxu0 0.0
        %1421 = vmatpush1.msra.mxu0 0.0
        %1422 = vmatprep.subr.mxu0 0.0
        %1423 = vmatpush1.msra.mxu0 0.0
        %1424 = vmatprep.subr.mxu0 0.0
        %1425 = vmatpush1.msra.mxu0 0.0
        %1426 = vmatprep.subr.mxu0 0.0
        %1427 = vmatpush1.msra.mxu0 0.0
        %1428 = vmatprep.subr.mxu0 0.0
        %1429 = vmatpush1.msra.mxu0 0.0
        %1430 = vmatprep.subr.mxu0 0.0
        %1431 = vmatpush1.msra.mxu0 0.0
        %1432 = vmatprep.subr.mxu0 0.0
        %1433 = vmatpush1.msra.mxu0 0.0
        %1434 = vmatprep.subr.mxu0 0.0
        %1435 = vmatpush1.msra.mxu0 0.0
        %1436 = vmatprep.subr.mxu0 0.0
        %1437 = vmatpush1.msra.mxu0 0.0
        %1438 = vmatprep.subr.mxu0 0.0
        %1439 = vmatpush1.msra.mxu0 0.0
        %1440 = vmatprep.subr.mxu0 0.0
        %1441 = vmatpush1.msra.mxu0 0.0
        %1442 = vmatprep.subr.mxu0 0.0
        %1443 = vmatpush1.msra.mxu0 0.0
        %1444 = vmatprep.subr.mxu0 0.0
        %1445 = vmatpush1.msra.mxu0 0.0
        %1446 = vmatprep.subr.mxu0 0.0
        %1447 = vmatpush1.msra.mxu0 0.0
        %1448 = vmatprep.subr.mxu0 0.0
        %1449 = vmatpush1.msra.mxu0 0.0
        %1450 = vmatprep.subr.mxu0 0.0
        %1451 = vmatpush1.msra.mxu0 0.0
        %1452 = vmatprep.subr.mxu0 0.0
        %1453 = vmatpush1.msra.mxu0 0.0
        %1454 = vmatprep.subr.mxu0 0.0
        %1455 = vmatpush1.msra.mxu0 0.0
        %1456 = vmatprep.subr.mxu0 0.0
        %1457 = vmatpush1.msra.mxu0 0.0
        %1458 = vmatprep.subr.mxu0 0.0
        %1459 = vmatpush1.msra.mxu0 0.0
        %1460 = vmatprep.subr.mxu0 0.0
        %1461 = vmatpush1.msra.mxu0 0.0
        %1462 = vmatprep.subr.mxu0 0.0
        %1463 = vmatpush1.msra.mxu0 0.0
        %1464 = vmatprep.subr.mxu0 0.0
        %1465 = vmatpush1.msra.mxu0 0.0
        %1466 = vmatprep.mubr.f32.mxu0 0.0
        %1467 = vmatmul.mubr.f32.gmra.mrb[0].mxu0 %v1400
        %v1468 = vpop.f32.mrb[0].mxu0
        %v1469 = vadd.f32 0.0, %v1468
        %v1470 = vpop.f32.mrb[0].mxu0
        %1471 = vdwg.mxu0
        %v1473 = vsel %vm660, %v1392, 0
        %1475 = vmatprep.subr.mxu0 0.0
        %1476 = vmatpush1.msra.mxu0 %v1396
        %1477 = vmatprep.subr.mxu0 0.0
        %1478 = vmatpush1.msra.mxu0 0.0
        %1479 = vmatprep.subr.mxu0 0.0
        %1480 = vmatpush1.msra.mxu0 0.0
        %1481 = vmatprep.subr.mxu0 0.0
        %1482 = vmatpush1.msra.mxu0 0.0
        %1483 = vmatprep.subr.mxu0 0.0
        %1484 = vmatpush1.msra.mxu0 0.0
        %1485 = vmatprep.subr.mxu0 0.0
        %1486 = vmatpush1.msra.mxu0 0.0
        %1487 = vmatprep.subr.mxu0 0.0
        %1488 = vmatpush1.msra.mxu0 0.0
        %1489 = vmatprep.subr.mxu0 0.0
        %1490 = vmatpush1.msra.mxu0 0.0
        %1491 = vmatprep.subr.mxu0 0.0
        %1492 = vmatpush1.msra.mxu0 0.0
        %1493 = vmatprep.subr.mxu0 0.0
        %1494 = vmatpush1.msra.mxu0 0.0
        %1495 = vmatprep.subr.mxu0 0.0
        %1496 = vmatpush1.msra.mxu0 0.0
        %1497 = vmatprep.subr.mxu0 0.0
        %1498 = vmatpush1.msra.mxu0 0.0
        %1499 = vmatprep.subr.mxu0 0.0
        %1500 = vmatpush1.msra.mxu0 0.0
        %1501 = vmatprep.subr.mxu0 0.0
        %1502 = vmatpush1.msra.mxu0 0.0
        %1503 = vmatprep.subr.mxu0 0.0
        %1504 = vmatpush1.msra.mxu0 0.0
        %1505 = vmatprep.subr.mxu0 0.0
        %1506 = vmatpush1.msra.mxu0 0.0
        %1507 = vmatprep.subr.mxu0 0.0
        %1508 = vmatpush1.msra.mxu0 0.0
        %1509 = vmatprep.subr.mxu0 0.0
        %1510 = vmatpush1.msra.mxu0 0.0
        %1511 = vmatprep.subr.mxu0 0.0
        %1512 = vmatpush1.msra.mxu0 0.0
        %1513 = vmatprep.subr.mxu0 0.0
        %1514 = vmatpush1.msra.mxu0 0.0
        %1515 = vmatprep.subr.mxu0 0.0
        %1516 = vmatpush1.msra.mxu0 0.0
        %1517 = vmatprep.subr.mxu0 0.0
        %1518 = vmatpush1.msra.mxu0 0.0
        %1519 = vmatprep.subr.mxu0 0.0
        %1520 = vmatpush1.msra.mxu0 0.0
        %1521 = vmatprep.subr.mxu0 0.0
        %1522 = vmatpush1.msra.mxu0 0.0
        %1523 = vmatprep.subr.mxu0 0.0
        %1524 = vmatpush1.msra.mxu0 0.0
        %1525 = vmatprep.subr.mxu0 0.0
        %1526 = vmatpush1.msra.mxu0 0.0
        %1527 = vmatprep.subr.mxu0 0.0
        %1528 = vmatpush1.msra.mxu0 0.0
        %1529 = vmatprep.subr.mxu0 0.0
        %1530 = vmatpush1.msra.mxu0 0.0
        %1531 = vmatprep.subr.mxu0 0.0
        %1532 = vmatpush1.msra.mxu0 0.0
        %1533 = vmatprep.subr.mxu0 0.0
        %1534 = vmatpush1.msra.mxu0 0.0
        %1535 = vmatprep.subr.mxu0 0.0
        %1536 = vmatpush1.msra.mxu0 0.0
        %1537 = vmatprep.subr.mxu0 0.0
        %1538 = vmatpush1.msra.mxu0 0.0
        %1539 = vmatprep.mubr.f32.mxu0 0.0
        %1540 = vmatmul.mubr.f32.gmra.mrb[0].mxu0 %v1473
        %v1541 = vpop.f32.mrb[0].mxu0
        %v1542 = vadd.f32 0.0, %v1541
        %v1543 = vpop.f32.mrb[0].mxu0
        %1544 = vdwg.mxu0
        %v1546 = vsel %vm660, %v1393, 0
        %1548 = vmatprep.subr.mxu0 0.0
        %1549 = vmatpush1.msra.mxu0 %v1397
        %1550 = vmatprep.subr.mxu0 0.0
        %1551 = vmatpush1.msra.mxu0 0.0
        %1552 = vmatprep.subr.mxu0 0.0
        %1553 = vmatpush1.msra.mxu0 0.0
        %1554 = vmatprep.subr.mxu0 0.0
        %1555 = vmatpush1.msra.mxu0 0.0
        %1556 = vmatprep.subr.mxu0 0.0
        %1557 = vmatpush1.msra.mxu0 0.0
        %1558 = vmatprep.subr.mxu0 0.0
        %1559 = vmatpush1.msra.mxu0 0.0
        %1560 = vmatprep.subr.mxu0 0.0
        %1561 = vmatpush1.msra.mxu0 0.0
        %1562 = vmatprep.subr.mxu0 0.0
        %1563 = vmatpush1.msra.mxu0 0.0
        %1564 = vmatprep.subr.mxu0 0.0
        %1565 = vmatpush1.msra.mxu0 0.0
        %1566 = vmatprep.subr.mxu0 0.0
        %1567 = vmatpush1.msra.mxu0 0.0
        %1568 = vmatprep.subr.mxu0 0.0
        %1569 = vmatpush1.msra.mxu0 0.0
        %1570 = vmatprep.subr.mxu0 0.0
        %1571 = vmatpush1.msra.mxu0 0.0
        %1572 = vmatprep.subr.mxu0 0.0
        %1573 = vmatpush1.msra.mxu0 0.0
        %1574 = vmatprep.subr.mxu0 0.0
        %1575 = vmatpush1.msra.mxu0 0.0
        %1576 = vmatprep.subr.mxu0 0.0
        %1577 = vmatpush1.msra.mxu0 0.0
        %1578 = vmatprep.subr.mxu0 0.0
        %1579 = vmatpush1.msra.mxu0 0.0
        %1580 = vmatprep.subr.mxu0 0.0
        %1581 = vmatpush1.msra.mxu0 0.0
        %1582 = vmatprep.subr.mxu0 0.0
        %1583 = vmatpush1.msra.mxu0 0.0
        %1584 = vmatprep.subr.mxu0 0.0
        %1585 = vmatpush1.msra.mxu0 0.0
        %1586 = vmatprep.subr.mxu0 0.0
        %1587 = vmatpush1.msra.mxu0 0.0
        %1588 = vmatprep.subr.mxu0 0.0
        %1589 = vmatpush1.msra.mxu0 0.0
        %1590 = vmatprep.subr.mxu0 0.0
        %1591 = vmatpush1.msra.mxu0 0.0
        %1592 = vmatprep.subr.mxu0 0.0
        %1593 = vmatpush1.msra.mxu0 0.0
        %1594 = vmatprep.subr.mxu0 0.0
        %1595 = vmatpush1.msra.mxu0 0.0
        %1596 = vmatprep.subr.mxu0 0.0
        %1597 = vmatpush1.msra.mxu0 0.0
        %1598 = vmatprep.subr.mxu0 0.0
        %1599 = vmatpush1.msra.mxu0 0.0
        %1600 = vmatprep.subr.mxu0 0.0
        %1601 = vmatpush1.msra.mxu0 0.0
        %1602 = vmatprep.subr.mxu0 0.0
        %1603 = vmatpush1.msra.mxu0 0.0
        %1604 = vmatprep.subr.mxu0 0.0
        %1605 = vmatpush1.msra.mxu0 0.0
        %1606 = vmatprep.subr.mxu0 0.0
        %1607 = vmatpush1.msra.mxu0 0.0
        %1608 = vmatprep.subr.mxu0 0.0
        %1609 = vmatpush1.msra.mxu0 0.0
        %1610 = vmatprep.subr.mxu0 0.0
        %1611 = vmatpush1.msra.mxu0 0.0
        %1612 = vmatprep.mubr.f32.mxu0 0.0
        %1613 = vmatmul.mubr.f32.gmra.mrb[0].mxu0 %v1546
        %v1614 = vpop.f32.mrb[0].mxu0
        %v1615 = vadd.f32 0.0, %v1614
        %v1616 = vpop.f32.mrb[0].mxu0
        %1617 = vdwg.mxu0
        %v1619 = vsel %vm660, %v1394, 0
        %1621 = vmatprep.subr.mxu0 0.0
        %1622 = vmatpush1.msra.mxu0 %v1398
        %1623 = vmatprep.subr.mxu0 0.0
        %1624 = vmatpush1.msra.mxu0 0.0
        %1625 = vmatprep.subr.mxu0 0.0
        %1626 = vmatpush1.msra.mxu0 0.0
        %1627 = vmatprep.subr.mxu0 0.0
        %1628 = vmatpush1.msra.mxu0 0.0
        %1629 = vmatprep.subr.mxu0 0.0
        %1630 = vmatpush1.msra.mxu0 0.0
        %1631 = vmatprep.subr.mxu0 0.0
        %1632 = vmatpush1.msra.mxu0 0.0
        %1633 = vmatprep.subr.mxu0 0.0
        %1634 = vmatpush1.msra.mxu0 0.0
        %1635 = vmatprep.subr.mxu0 0.0
        %1636 = vmatpush1.msra.mxu0 0.0
        %1637 = vmatprep.subr.mxu0 0.0
        %1638 = vmatpush1.msra.mxu0 0.0
        %1639 = vmatprep.subr.mxu0 0.0
        %1640 = vmatpush1.msra.mxu0 0.0
        %1641 = vmatprep.subr.mxu0 0.0
        %1642 = vmatpush1.msra.mxu0 0.0
        %1643 = vmatprep.subr.mxu0 0.0
        %1644 = vmatpush1.msra.mxu0 0.0
        %1645 = vmatprep.subr.mxu0 0.0
        %1646 = vmatpush1.msra.mxu0 0.0
        %1647 = vmatprep.subr.mxu0 0.0
        %1648 = vmatpush1.msra.mxu0 0.0
        %1649 = vmatprep.subr.mxu0 0.0
        %1650 = vmatpush1.msra.mxu0 0.0
        %1651 = vmatprep.subr.mxu0 0.0
        %1652 = vmatpush1.msra.mxu0 0.0
        %1653 = vmatprep.subr.mxu0 0.0
        %1654 = vmatpush1.msra.mxu0 0.0
        %1655 = vmatprep.subr.mxu0 0.0
        %1656 = vmatpush1.msra.mxu0 0.0
        %1657 = vmatprep.subr.mxu0 0.0
        %1658 = vmatpush1.msra.mxu0 0.0
        %1659 = vmatprep.subr.mxu0 0.0
        %1660 = vmatpush1.msra.mxu0 0.0
        %1661 = vmatprep.subr.mxu0 0.0
        %1662 = vmatpush1.msra.mxu0 0.0
        %1663 = vmatprep.subr.mxu0 0.0
        %1664 = vmatpush1.msra.mxu0 0.0
        %1665 = vmatprep.subr.mxu0 0.0
        %1666 = vmatpush1.msra.mxu0 0.0
        %1667 = vmatprep.subr.mxu0 0.0
        %1668 = vmatpush1.msra.mxu0 0.0
        %1669 = vmatprep.subr.mxu0 0.0
        %1670 = vmatpush1.msra.mxu0 0.0
        %1671 = vmatprep.subr.mxu0 0.0
        %1672 = vmatpush1.msra.mxu0 0.0
        %1673 = vmatprep.subr.mxu0 0.0
        %1674 = vmatpush1.msra.mxu0 0.0
        %1675 = vmatprep.subr.mxu0 0.0
        %1676 = vmatpush1.msra.mxu0 0.0
        %1677 = vmatprep.subr.mxu0 0.0
        %1678 = vmatpush1.msra.mxu0 0.0
        %1679 = vmatprep.subr.mxu0 0.0
        %1680 = vmatpush1.msra.mxu0 0.0
        %1681 = vmatprep.subr.mxu0 0.0
        %1682 = vmatpush1.msra.mxu0 0.0
        %1683 = vmatprep.subr.mxu0 0.0
        %1684 = vmatpush1.msra.mxu0 0.0
        %1685 = vmatprep.mubr.f32.mxu0 0.0
        %1686 = vmatmul.mubr.f32.gmra.mrb[0].mxu0 %v1619
        %v1687 = vpop.f32.mrb[0].mxu0
        %v1688 = vadd.f32 0.0, %v1687
        %v1689 = vpop.f32.mrb[0].mxu0
        %1690 = vdwg.mxu0
        %v1691 = vsel %vm359, %v1469, 0.0
        %v1692 = vsel %vm359, %v1542, 0.0
        %v1693 = vadd.f32 %v1691, %v1692
        %v1694 = vsel %vm359, %v1615, 0.0
        %v1695 = vadd.f32 %v1693, %v1694
        %v1696 = vsel %vm359, %v1688, 0.0
        %v1697 = vadd.f32 %v1695, %v1696
        %v1698 = vld [vmem:[#allocation12] sm:$0x1]
        %v1700 = vlaneseq
        %v1701 = vshrl.u32 %v1700, 7
        %v1702 = vsub.s32 0, %v1701
        %v1703 = vrot.slane %v1698, %v1702
        %v1705 = vadd.f32 %v1697, %v1703
        %1706 = vst.msk [vmem:[%s312] sm:$0xff] %vm359, %v1705
        %s1707 = sand.u32 %s158, 1
        %s1708 = scalar_lea.sflag [#allocation6], %s1707
        %s1709 = sand.u32 %s158, 1
        %s1710 = smul.addr %s1709, 8
        %s1711 = scalar_lea.vmem [#allocation13], %s1710
        // Predicated region
        $region68: #{tpu_custom_call.1} parent=39 // pred_check
          %p1712 = pneg %p168
        $region69: #{tpu_custom_call.1} parent=39 // pred_check_branch
          %1714 = sbr.rel (%p1712) target = $region71
        $region70: #{tpu_custom_call.1} parent=39 // pred_region
          %s1716 = ssub.s32 128, 128
          %1717 = vsyncadd %s1708, %s1716
          %s1718 = sadd.s32 %s29, %s28
          %s1719 = smul.addr %s1718, 128
          %s1720 = scalar_lea.hbm %s5, %s1719
          %s1722 = sshll.u32 %s1711, 4
          %s1723 = int_to_ptr.vmem [resolvable:$true] %s1722
          %1725 = dma.vmem_to_hbm [thread:$0]  %s1723, 128, %s1720, %s1708
        $region71: #{tpu_custom_call.1} parent=39 // pred_fallthru
          _
      $region40: #{tpu_custom_call.1} parent=5 // pred_fallthru
        _
      %p1726 = scmp.le.s32.totalorder 2, %s19
      // Predicated region
      $region72: #{tpu_custom_call.1} parent=5 // pred_check
        %p1727 = pneg %p1726
      $region73: #{tpu_custom_call.1} parent=5 // pred_check_branch
        %1729 = sbr.rel (%p1727) target = $region75
      $region74: #{tpu_custom_call.1} parent=5 // pred_region
        %s1730 = ssub.s32 %s19, 2
        // Predicated region
        $region76: #{tpu_custom_call.1} parent=74 // pred_check
          %p1731 = pneg %p174
        $region77: #{tpu_custom_call.1} parent=74 // pred_check_branch
          %1733 = sbr.rel (%p1731) target = $region79
        $region78: #{tpu_custom_call.1} parent=74 // pred_region
          %s1734 = sand.u32 %s159, 1
          %s1735 = scalar_lea.sflag [#allocation6], %s1734
          %s1736 = sand.u32 %s159, 1
          %s1737 = smul.addr %s1736, 8
          %s1738 = scalar_lea.vmem [#allocation13], %s1737
          %1739 = dma.done %s1735, 128
        $region79: #{tpu_custom_call.1} parent=74 // pred_fallthru
          _
      $region75: #{tpu_custom_call.1} parent=5 // pred_fallthru
        _
    $region6: #{tpu_custom_call.1} parent=1 // loop_footer
      %s23 = sadd.s32 1, %s19
    $region7: #{tpu_custom_call.1} parent=1 // loop_footer_branch
      %18 = sbr.rel target = $region3
    $region8: #{tpu_custom_call.1} parent=1 // loop_exit
      _
    %1740 = vsyncpa [#allocation5], 1
    %s1741 = scalar_lea.sflag [#allocation5], 1
    %1742 = vsyncpa %s1741, 1
    %1743 = vsyncpa [#allocation8], 1
    %1744 = vsyncpa [#allocation11], 1
    %1745 = vsyncpa [#allocation6], 1
    %s1746 = scalar_lea.sflag [#allocation6], 1
    %1747 = vsyncpa %s1746, 1

</llo_original>
